<compile_context>
chip_gen: v6e
topology: v6e:2x2x1
jax: 0.10.0
libtpu: 0.0.40
codegen_flags: <defaults>
</compile_context>

<pallas_src>
import jax
import jax.numpy as jnp
from jax.experimental import pallas as pl
from jax.experimental.pallas import tpu as pltpu

ADDA_ENC_HIDDEN_LAYER_SIZES = (1024, 512)
LEAKY_SLOPE = 0.01  # nn.LeakyReLU default negative_slope
BN_EPS = 1e-3       # the module explicitly passes eps=0.001 to BatchNorm1d


def _leaky_relu(x):
    return jnp.where(x >= 0, x, LEAKY_SLOPE * x)


def _round_up(n, m):
    return ((n + m - 1) // m) * m


def mlp_decoder_kernel(x_ref, w1_ref, b1_ref, w2_ref, b2_ref, w3_ref, b3_ref, o_ref):
    """Fused 3-layer MLP decoder for one batch tile.

    Weights (bf16, BN pre-folded) are fully resident in VMEM; only the batch
    dimension is tiled by the grid. Matmuls accumulate in f32 on the MXU,
    bias/activation/sigmoid run in f32 on the VPU/EUP.
    """
    # Layer 1: Linear(emb_dim -> 512) [BN folded] + LeakyReLU (Dropout = id)
    h1 = jnp.dot(x_ref[...], w1_ref[...], preferred_element_type=jnp.float32)
    h1 = _leaky_relu(h1 + b1_ref[...])

    # Layer 2: Linear(512 -> 1024) [BN folded] + LeakyReLU (Dropout = id)
    h2 = jnp.dot(h1.astype(jnp.bfloat16), w2_ref[...],
                 preferred_element_type=jnp.float32)
    h2 = _leaky_relu(h2 + b2_ref[...])

    # Output layer: Linear(1024 -> inp_dim_padded) + Sigmoid
    o = jnp.dot(h2.astype(jnp.bfloat16), w3_ref[...],
                preferred_element_type=jnp.float32)
    o_ref[...] = jax.nn.sigmoid(o + b3_ref[...]).astype(o_ref.dtype)


def adda_mlp_decoder_forward(x, params, *, batch_tile=256):
    """Run the fused decoder kernel.

    x: [N, emb_dim] float (any float dtype; cast to bf16 for the matmuls)
    params: dict of weights (see init_params).
    """
    N, emb_dim = x.shape
    h1_dim = params["w1"].shape[1]
    h2_dim = params["w2"].shape[1]
    inp_dim = params["w3"].shape[1]

    # ---- plain-JAX glue: fold eval-mode BN into the Linear weights ----------
    s1 = params["bn1_gamma"] / jnp.sqrt(params["bn1_var"] + BN_EPS)
    t1 = params["bn1_beta"] - params["bn1_mean"] * s1
    s2 = params["bn2_gamma"] / jnp.sqrt(params["bn2_var"] + BN_EPS)
    t2 = params["bn2_beta"] - params["bn2_mean"] * s2

    w1 = (params["w1"] * s1[None, :]).astype(jnp.bfloat16)
    b1 = (params["b1"] * s1 + t1).astype(jnp.float32).reshape(1, -1)
    w2 = (params["w2"] * s2[None, :]).astype(jnp.bfloat16)
    b2 = (params["b2"] * s2 + t2).astype(jnp.float32).reshape(1, -1)

    # Pad the output layer to a lane-dense width (multiple of 128) so stores
    # are unmasked; padded columns are zero -> sigmoid(0)=0.5, sliced off below.
    out_pad = _round_up(inp_dim, 128)
    w3 = jnp.zeros((h2_dim, out_pad), jnp.bfloat16).at[:, :inp_dim].set(
        params["w3"].astype(jnp.bfloat16))
    b3 = jnp.zeros((1, out_pad), jnp.float32).at[:, :inp_dim].set(
        params["b3"].astype(jnp.float32))

    # Batch tiling: large tile for MXU/M utilization, padded N (no assert).
    tile = min(batch_tile, _round_up(N, 8))
    n_pad = _round_up(N, tile)
    x_p = jnp.zeros((n_pad, emb_dim), jnp.bfloat16).at[:N].set(
        x.astype(jnp.bfloat16))

    full = lambda shape: pl.BlockSpec(shape, lambda i: (0, 0))

    out = pl.pallas_call(
        mlp_decoder_kernel,
        out_shape=jax.ShapeDtypeStruct((n_pad, out_pad), jnp.float32),
        grid_spec=pltpu.PrefetchScalarGridSpec(
            num_scalar_prefetch=0,
            grid=(n_pad // tile,),
            in_specs=[
                pl.BlockSpec((tile, emb_dim), lambda i: (i, 0)),  # x tile
                full((emb_dim, h1_dim)), full((1, h1_dim)),       # W1', b1'
                full((h1_dim, h2_dim)), full((1, h2_dim)),        # W2', b2'
                full((h2_dim, out_pad)), full((1, out_pad)),      # W3,  b3
            ],
            out_specs=pl.BlockSpec((tile, out_pad), lambda i: (i, 0)),
        ),
        compiler_params=pltpu.CompilerParams(
            dimension_semantics=("parallel",),
        ),
    )(x_p, w1, b1, w2, b2, w3, b3)

    return out[:N, :inp_dim]


def init_params(key, inp_dim, emb_dim, hidden_layer_sizes=ADDA_ENC_HIDDEN_LAYER_SIZES):
    """Deterministic synthetic parameter init (matches module shapes)."""
    h_rev = tuple(reversed(hidden_layer_sizes))  # (512, 1024)
    dims = [emb_dim] + list(h_rev) + [inp_dim]   # emb -> 512 -> 1024 -> inp
    keys = jax.random.split(key, 16)
    k = iter(keys)

    def linear(kw, kb, fan_in, fan_out):
        bound = 1.0 / jnp.sqrt(fan_in)
        w = jax.random.uniform(kw, (fan_in, fan_out), jnp.float32, -bound, bound)
        b = jax.random.uniform(kb, (fan_out,), jnp.float32, -bound, bound)
        return w, b

    w1, b1 = linear(next(k), next(k), dims[0], dims[1])
    w2, b2 = linear(next(k), next(k), dims[1], dims[2])
    w3, b3 = linear(next(k), next(k), dims[2], dims[3])

    params = {
        "w1": w1, "b1": b1,
        "bn1_gamma": jnp.ones((dims[1],), jnp.float32),
        "bn1_beta": jnp.zeros((dims[1],), jnp.float32),
        "bn1_mean": 0.1 * jax.random.normal(next(k), (dims[1],), jnp.float32),
        "bn1_var": jnp.abs(1.0 + 0.1 * jax.random.normal(next(k), (dims[1],), jnp.float32)),
        "w2": w2, "b2": b2,
        "bn2_gamma": jnp.ones((dims[2],), jnp.float32),
        "bn2_beta": jnp.zeros((dims[2],), jnp.float32),
        "bn2_mean": 0.1 * jax.random.normal(next(k), (dims[2],), jnp.float32),
        "bn2_var": jnp.abs(1.0 + 0.1 * jax.random.normal(next(k), (dims[2],), jnp.float32)),
        "w3": w3, "b3": b3,
    }
    return params


def reference_forward(x, params):
    """Plain-JAX f32 reference (eval-mode BN with eps=0.001, identity dropout)."""
    h = x @ params["w1"] + params["b1"]
    h = (h - params["bn1_mean"]) / jnp.sqrt(params["bn1_var"] + BN_EPS)
    h = h * params["bn1_gamma"] + params["bn1_beta"]
    h = jnp.where(h >= 0, h, LEAKY_SLOPE * h)
    h = h @ params["w2"] + params["b2"]
    h = (h - params["bn2_mean"]) / jnp.sqrt(params["bn2_var"] + BN_EPS)
    h = h * params["bn2_gamma"] + params["bn2_beta"]
    h = jnp.where(h >= 0, h, LEAKY_SLOPE * h)
    o = h @ params["w3"] + params["b3"]
    return jax.nn.sigmoid(o)


if __name__ == "__main__":
    key = jax.random.PRNGKey(0)
    k_param, k_x = jax.random.split(key)

    batch = 8
    emb_dim = 32   # embedding size
    inp_dim = 64   # number of gene-expression features (decoder output dim)

    params = init_params(k_param, inp_dim=inp_dim, emb_dim=emb_dim)
    x = jax.random.normal(k_x, (batch, emb_dim), jnp.float32)

    out = adda_mlp_decoder_forward(x, params)
    out = jax.block_until_ready(out)

    ref = reference_forward(x, params)
    assert out.shape == (batch, inp_dim)
    # bf16 matmul operands with f32 accumulation -> loosened tolerance vs f32 ref.
    assert jnp.allclose(out, ref, atol=1e-2, rtol=1e-2), "mismatch vs reference"

    print("KERNEL_OK")
</pallas_src>

<mosaic_0001>
module attributes {stable_mosaic.version = 11 : i64} {
  func.func @mlp_decoder_kernel(%arg0: i32, %arg1: memref<8x32xbf16, #tpu.memory_space<vmem>>, %arg2: memref<32x512xbf16, #tpu.memory_space<vmem>>, %arg3: memref<1x512xf32, #tpu.memory_space<vmem>>, %arg4: memref<512x1024xbf16, #tpu.memory_space<vmem>>, %arg5: memref<1x1024xf32, #tpu.memory_space<vmem>>, %arg6: memref<1024x128xbf16, #tpu.memory_space<vmem>>, %arg7: memref<1x128xf32, #tpu.memory_space<vmem>>, %arg8: memref<8x128xf32, #tpu.memory_space<vmem>>) attributes {dimension_semantics = [#tpu.dimension_semantics<parallel>], iteration_bounds = array<i64: 1>, scalar_prefetch = 0 : i64, scratch_operands = 0 : i64, tpu.core_type = #tpu.core_type<tc>, window_params = [{transform_indices = @transform_0, window_bounds = array<i64: 8, 32>}, {pipeline_mode = #tpu.pipeline_mode<synchronous>, transform_indices = @transform_1, window_bounds = array<i64: 32, 512>}, {pipeline_mode = #tpu.pipeline_mode<synchronous>, transform_indices = @transform_2, window_bounds = array<i64: 1, 512>}, {pipeline_mode = #tpu.pipeline_mode<synchronous>, transform_indices = @transform_3, window_bounds = array<i64: 512, 1024>}, {pipeline_mode = #tpu.pipeline_mode<synchronous>, transform_indices = @transform_4, window_bounds = array<i64: 1, 1024>}, {pipeline_mode = #tpu.pipeline_mode<synchronous>, transform_indices = @transform_5, window_bounds = array<i64: 1024, 128>}, {pipeline_mode = #tpu.pipeline_mode<synchronous>, transform_indices = @transform_6, window_bounds = array<i64: 1, 128>}, {transform_indices = @transform_7, window_bounds = array<i64: 8, 128>}]} {
    %c0 = arith.constant 0 : index
    %c0_0 = arith.constant 0 : index
    %0 = vector.load %arg1[%c0, %c0_0] : memref<8x32xbf16, #tpu.memory_space<vmem>>, vector<8x32xbf16>
    %c0_1 = arith.constant 0 : index
    %c0_2 = arith.constant 0 : index
    %1 = vector.load %arg2[%c0_1, %c0_2] : memref<32x512xbf16, #tpu.memory_space<vmem>>, vector<32x512xbf16>
    %cst = arith.constant dense<0.000000e+00> : vector<8x512xf32>
    %2 = tpu.matmul %0, %1, %cst {dimension_numbers = #tpu.dot_dimension_numbers<[1], [0], [0], [1], [0, 0, 1, 1], [], []>} : vector<8x32xbf16>, vector<32x512xbf16>, vector<8x512xf32> -> vector<8x512xf32>
    %c0_3 = arith.constant 0 : index
    %c0_4 = arith.constant 0 : index
    %3 = vector.load %arg3[%c0_3, %c0_4] : memref<1x512xf32, #tpu.memory_space<vmem>>, vector<1x512xf32>
    %4 = vector.broadcast %3 : vector<1x512xf32> to vector<8x512xf32>
    %5 = arith.addf %2, %4 : vector<8x512xf32>
    %cst_5 = arith.constant 0.000000e+00 : f32
    %6 = vector.broadcast %cst_5 : f32 to vector<8x512xf32>
    %7 = arith.cmpf oge, %5, %6 : vector<8x512xf32>
    %cst_6 = arith.constant 0.00999999977 : f32
    %8 = vector.broadcast %cst_6 : f32 to vector<8x512xf32>
    %9 = arith.mulf %8, %5 : vector<8x512xf32>
    %10 = arith.select %7, %5, %9 : vector<8x512xi1>, vector<8x512xf32>
    %11 = arith.truncf %10 : vector<8x512xf32> to vector<8x512xbf16>
    %c0_7 = arith.constant 0 : index
    %c0_8 = arith.constant 0 : index
    %12 = vector.load %arg4[%c0_7, %c0_8] : memref<512x1024xbf16, #tpu.memory_space<vmem>>, vector<512x1024xbf16>
    %cst_9 = arith.constant dense<0.000000e+00> : vector<8x1024xf32>
    %13 = tpu.matmul %11, %12, %cst_9 {dimension_numbers = #tpu.dot_dimension_numbers<[1], [0], [0], [1], [0, 0, 1, 1], [], []>} : vector<8x512xbf16>, vector<512x1024xbf16>, vector<8x1024xf32> -> vector<8x1024xf32>
    %c0_10 = arith.constant 0 : index
    %c0_11 = arith.constant 0 : index
    %14 = vector.load %arg5[%c0_10, %c0_11] : memref<1x1024xf32, #tpu.memory_space<vmem>>, vector<1x1024xf32>
    %15 = vector.broadcast %14 : vector<1x1024xf32> to vector<8x1024xf32>
    %16 = arith.addf %13, %15 : vector<8x1024xf32>
    %cst_12 = arith.constant 0.000000e+00 : f32
    %17 = vector.broadcast %cst_12 : f32 to vector<8x1024xf32>
    %18 = arith.cmpf oge, %16, %17 : vector<8x1024xf32>
    %cst_13 = arith.constant 0.00999999977 : f32
    %19 = vector.broadcast %cst_13 : f32 to vector<8x1024xf32>
    %20 = arith.mulf %19, %16 : vector<8x1024xf32>
    %21 = arith.select %18, %16, %20 : vector<8x1024xi1>, vector<8x1024xf32>
    %22 = arith.truncf %21 : vector<8x1024xf32> to vector<8x1024xbf16>
    %c0_14 = arith.constant 0 : index
    %c0_15 = arith.constant 0 : index
    %23 = vector.load %arg6[%c0_14, %c0_15] : memref<1024x128xbf16, #tpu.memory_space<vmem>>, vector<1024x128xbf16>
    %cst_16 = arith.constant dense<0.000000e+00> : vector<8x128xf32>
    %24 = tpu.matmul %22, %23, %cst_16 {dimension_numbers = #tpu.dot_dimension_numbers<[1], [0], [0], [1], [0, 0, 1, 1], [], []>} : vector<8x1024xbf16>, vector<1024x128xbf16>, vector<8x128xf32> -> vector<8x128xf32>
    %c0_17 = arith.constant 0 : index
    %c0_18 = arith.constant 0 : index
    %25 = vector.load %arg7[%c0_17, %c0_18] : memref<1x128xf32, #tpu.memory_space<vmem>>, vector<1x128xf32>
    %26 = vector.broadcast %25 : vector<1x128xf32> to vector<8x128xf32>
    %27 = arith.addf %24, %26 : vector<8x128xf32>
    %28 = arith.negf %27 : vector<8x128xf32>
    %29 = math.exp %28 : vector<8x128xf32>
    %cst_19 = arith.constant 1.000000e+00 : f32
    %30 = vector.broadcast %cst_19 : f32 to vector<8x128xf32>
    %31 = arith.addf %30, %29 : vector<8x128xf32>
    %32 = arith.divf %30, %31 : vector<8x128xf32>
    %c0_20 = arith.constant 0 : index
    %c0_21 = arith.constant 0 : index
    %33 = vector.load %arg8[%c0_20, %c0_21] : memref<8x128xf32, #tpu.memory_space<vmem>>, vector<8x128xf32>
    tpu.vector_store %arg8[%c0_20, %c0_21], %32 {strides = array<i32>} : memref<8x128xf32, #tpu.memory_space<vmem>>, vector<8x128xf32>,
    return
  }
  func.func @transform_0(%arg0: i32) -> (i32, i32) {
    %c0_i32 = arith.constant 0 : i32
    %c0_i32_0 = arith.constant 0 : i32
    return %arg0, %c0_i32 : i32, i32
  }
  func.func @transform_1(%arg0: i32) -> (i32, i32) {
    %c0_i32 = arith.constant 0 : i32
    %c0_i32_0 = arith.constant 0 : i32
    %c0_i32_1 = arith.constant 0 : i32
    return %c0_i32, %c0_i32_0 : i32, i32
  }
  func.func @transform_2(%arg0: i32) -> (i32, i32) {
    %c0_i32 = arith.constant 0 : i32
    %c0_i32_0 = arith.constant 0 : i32
    %c0_i32_1 = arith.constant 0 : i32
    return %c0_i32, %c0_i32_0 : i32, i32
  }
  func.func @transform_3(%arg0: i32) -> (i32, i32) {
    %c0_i32 = arith.constant 0 : i32
    %c0_i32_0 = arith.constant 0 : i32
    %c0_i32_1 = arith.constant 0 : i32
    return %c0_i32, %c0_i32_0 : i32, i32
  }
  func.func @transform_4(%arg0: i32) -> (i32, i32) {
    %c0_i32 = arith.constant 0 : i32
    %c0_i32_0 = arith.constant 0 : i32
    %c0_i32_1 = arith.constant 0 : i32
    return %c0_i32, %c0_i32_0 : i32, i32
  }
  func.func @transform_5(%arg0: i32) -> (i32, i32) {
    %c0_i32 = arith.constant 0 : i32
    %c0_i32_0 = arith.constant 0 : i32
    %c0_i32_1 = arith.constant 0 : i32
    return %c0_i32, %c0_i32_0 : i32, i32
  }
  func.func @transform_6(%arg0: i32) -> (i32, i32) {
    %c0_i32 = arith.constant 0 : i32
    %c0_i32_0 = arith.constant 0 : i32
    %c0_i32_1 = arith.constant 0 : i32
    return %c0_i32, %c0_i32_0 : i32, i32
  }
  func.func @transform_7(%arg0: i32) -> (i32, i32) {
    %c0_i32 = arith.constant 0 : i32
    %c0_i32_0 = arith.constant 0 : i32
    return %arg0, %c0_i32 : i32, i32
  }
}

</mosaic_0001>

<llo_original>
// kernel: tpu_custom_call.1
$region0: #{tpu_custom_call.1}
  #allocation0 [shape = 'u32[]', space=smem, size = 0x4, offset = 0x4, fixed_abs, tag = 'smem constant byte address 0x4 - core index']
  #allocation1 [shape = 'u32[144,128]{1,0:T(1,128)}', space=vmem, size = 0x12000, scoped, tag = 'internal scratch']
  %s0 = inlined_call_operand.hbm [shape: bf16[8,32], index: 0, kind: input, shape index: {}]
  %s1 = inlined_call_operand.hbm [shape: bf16[32,512], index: 1, kind: input, shape index: {}]
  %s2 = inlined_call_operand.hbm [shape: f32[1,512], index: 2, kind: input, shape index: {}]
  %s3 = inlined_call_operand.hbm [shape: bf16[512,1024], index: 3, kind: input, shape index: {}]
  %s4 = inlined_call_operand.hbm [shape: f32[1,1024], index: 4, kind: input, shape index: {}]
  %s5 = inlined_call_operand.hbm [shape: bf16[1024,128], index: 5, kind: input, shape index: {}]
  %s6 = inlined_call_operand.vmem [shape: f32[1,128], index: 6, kind: input, shape index: {}]
  %s7 = inlined_call_operand.hbm [shape: f32[8,128], index: 7, kind: output, shape index: {}]
  %s8 = sld [smem:[#allocation0]]
  $region62: #{tpu_custom_call.1} parent=0
    _
  %s10 = ssub.s32 1, %s8
  %s11 = scalar_select 0, %s10, %s8
  $region1: #{tpu_custom_call.1} parent=0
    #allocation2 [shape = 'u8[2048]{0}', space=vmem, size = 0x800, scoped, tag = 'input window, operand 0, single buffered']
    #allocation3 [shape = 's32[1]{0}', space=sflag, size = 0x4, scoped, tag = 'scoped memory for tpu_custom_call.1']
    #allocation4 [shape = 's32[1]{0}', space=sflag, size = 0x4, scoped, tag = 'scoped memory for tpu_custom_call.1']
    #allocation5 [shape = 'u8[32768]{0}', space=vmem, size = 0x8000, scoped, tag = 'input window, operand 1, single buffered']
    #allocation6 [shape = 's32[1]{0}', space=sflag, size = 0x4, scoped, tag = 'scoped memory for tpu_custom_call.1']
    #allocation7 [shape = 'u8[2048]{0}', space=vmem, size = 0x800, scoped, tag = 'input window, operand 2, single buffered']
    #allocation8 [shape = 'u8[1048576]{0}', space=vmem, size = 0x100000, scoped, tag = 'input window, operand 3, single buffered']
    #allocation9 [shape = 's32[1]{0}', space=sflag, size = 0x4, scoped, tag = 'scoped memory for tpu_custom_call.1']
    #allocation10 [shape = 'u8[4096]{0}', space=vmem, size = 0x1000, scoped, tag = 'input window, operand 4, single buffered']
    #allocation11 [shape = 'u8[262144]{0}', space=vmem, size = 0x40000, scoped, tag = 'input window, operand 5, single buffered']
    #allocation12 [shape = 's32[1]{0}', space=sflag, size = 0x4, scoped, tag = 'scoped memory for tpu_custom_call.1']
    #allocation13 [shape = 'u8[4096]{0}', space=vmem, size = 0x1000, scoped, tag = 'output window, operand 0, single buffered']
    %12 = vsyncpa [#allocation3], 0
    %13 = vsyncpa [#allocation6], 0
    %14 = vsyncpa [#allocation9], 0
    %15 = vsyncpa [#allocation12], 0
    %16 = vsyncpa [#allocation4], 0
    // Predicated region
    $region2: #{tpu_custom_call.1} parent=1 // pred_check
      _
    $region3: #{tpu_custom_call.1} parent=1 // pred_check_branch
      %18 = sbr.rel (0) target = $region5
    $region4: #{tpu_custom_call.1} parent=1 // pred_region
      %s20 = ssub.s32 64, 64
      %21 = vsyncadd [#allocation3], %s20
      %s23 = sshll.u32 [#allocation2], 4
      %s24 = int_to_ptr.vmem [resolvable:$true] %s23
      %26 = dma.hbm_to_vmem [thread:$0]  %s0, 64, %s24, [#allocation3]
    $region5: #{tpu_custom_call.1} parent=1 // pred_fallthru
      _
    // Predicated region
    $region6: #{tpu_custom_call.1} parent=1 // pred_check
      _
    $region7: #{tpu_custom_call.1} parent=1 // pred_check_branch
      %28 = sbr.rel (0) target = $region9
    $region8: #{tpu_custom_call.1} parent=1 // pred_region
      %s30 = ssub.s32 1024, 1024
      %31 = vsyncadd [#allocation6], %s30
      %s32 = sshll.u32 [#allocation5], 4
      %s33 = int_to_ptr.vmem [resolvable:$true] %s32
      %38 = dma.hbm_to_vmem [thread:$0]  %s1, 1024, %s33, [#allocation6], 256, 256, 16
    $region9: #{tpu_custom_call.1} parent=1 // pred_fallthru
      _
    // Predicated region
    $region10: #{tpu_custom_call.1} parent=1 // pred_check
      _
    $region11: #{tpu_custom_call.1} parent=1 // pred_check_branch
      %40 = sbr.rel (0) target = $region13
    $region12: #{tpu_custom_call.1} parent=1 // pred_region
      %s42 = ssub.s32 64, 64
      %43 = vsyncadd [#allocation6], %s42
      %s45 = sshll.u32 [#allocation7], 4
      %s46 = int_to_ptr.vmem [resolvable:$true] %s45
      %48 = dma.hbm_to_vmem [thread:$0]  %s2, 64, %s46, [#allocation6]
    $region13: #{tpu_custom_call.1} parent=1 // pred_fallthru
      _
    // Predicated region
    $region14: #{tpu_custom_call.1} parent=1 // pred_check
      _
    $region15: #{tpu_custom_call.1} parent=1 // pred_check_branch
      %50 = sbr.rel (0) target = $region17
    $region16: #{tpu_custom_call.1} parent=1 // pred_region
      %s52 = ssub.s32 32768, 32768
      %53 = vsyncadd [#allocation9], %s52
      %s54 = sshll.u32 [#allocation8], 4
      %s55 = int_to_ptr.vmem [resolvable:$true] %s54
      %60 = dma.hbm_to_vmem [thread:$0]  %s3, 32768, %s55, [#allocation9], 512, 512, 32
    $region17: #{tpu_custom_call.1} parent=1 // pred_fallthru
      _
    // Predicated region
    $region18: #{tpu_custom_call.1} parent=1 // pred_check
      _
    $region19: #{tpu_custom_call.1} parent=1 // pred_check_branch
      %62 = sbr.rel (0) target = $region21
    $region20: #{tpu_custom_call.1} parent=1 // pred_region
      %s64 = ssub.s32 128, 128
      %65 = vsyncadd [#allocation9], %s64
      %s67 = sshll.u32 [#allocation10], 4
      %s68 = int_to_ptr.vmem [resolvable:$true] %s67
      %70 = dma.hbm_to_vmem [thread:$0]  %s4, 128, %s68, [#allocation9]
    $region21: #{tpu_custom_call.1} parent=1 // pred_fallthru
      _
    // Predicated region
    $region22: #{tpu_custom_call.1} parent=1 // pred_check
      _
    $region23: #{tpu_custom_call.1} parent=1 // pred_check_branch
      %72 = sbr.rel (0) target = $region25
    $region24: #{tpu_custom_call.1} parent=1 // pred_region
      %s74 = ssub.s32 8192, 8192
      %75 = vsyncadd [#allocation12], %s74
      %s76 = sshll.u32 [#allocation11], 4
      %s77 = int_to_ptr.vmem [resolvable:$true] %s76
      %82 = dma.hbm_to_vmem [thread:$0]  %s5, 8192, %s77, [#allocation12], 64, 64, 4
    $region25: #{tpu_custom_call.1} parent=1 // pred_fallthru
      _
    // Predicated region
    $region26: #{tpu_custom_call.1} parent=1 // pred_check
      _
    $region27: #{tpu_custom_call.1} parent=1 // pred_check_branch
      %84 = sbr.rel (0) target = $region29
    $region28: #{tpu_custom_call.1} parent=1 // pred_region
      _
    $region29: #{tpu_custom_call.1} parent=1 // pred_fallthru
      _
    // Predicated region
    $region30: #{tpu_custom_call.1} parent=1 // pred_check
      _
    $region31: #{tpu_custom_call.1} parent=1 // pred_check_branch
      %86 = sbr.rel (0) target = $region33
    $region32: #{tpu_custom_call.1} parent=1 // pred_region
      %87 = dma.done [#allocation3], 64
    $region33: #{tpu_custom_call.1} parent=1 // pred_fallthru
      _
    // Predicated region
    $region34: #{tpu_custom_call.1} parent=1 // pred_check
      _
    $region35: #{tpu_custom_call.1} parent=1 // pred_check_branch
      %89 = sbr.rel (0) target = $region37
    $region36: #{tpu_custom_call.1} parent=1 // pred_region
      %90 = dma.done [#allocation6], 1024
    $region37: #{tpu_custom_call.1} parent=1 // pred_fallthru
      _
    // Predicated region
    $region38: #{tpu_custom_call.1} parent=1 // pred_check
      _
    $region39: #{tpu_custom_call.1} parent=1 // pred_check_branch
      %92 = sbr.rel (0) target = $region41
    $region40: #{tpu_custom_call.1} parent=1 // pred_region
      %93 = dma.done [#allocation6], 64
    $region41: #{tpu_custom_call.1} parent=1 // pred_fallthru
      _
    // Predicated region
    $region42: #{tpu_custom_call.1} parent=1 // pred_check
      _
    $region43: #{tpu_custom_call.1} parent=1 // pred_check_branch
      %95 = sbr.rel (0) target = $region45
    $region44: #{tpu_custom_call.1} parent=1 // pred_region
      %96 = dma.done [#allocation9], 32768
    $region45: #{tpu_custom_call.1} parent=1 // pred_fallthru
      _
    // Predicated region
    $region46: #{tpu_custom_call.1} parent=1 // pred_check
      _
    $region47: #{tpu_custom_call.1} parent=1 // pred_check_branch
      %98 = sbr.rel (0) target = $region49
    $region48: #{tpu_custom_call.1} parent=1 // pred_region
      %99 = dma.done [#allocation9], 128
    $region49: #{tpu_custom_call.1} parent=1 // pred_fallthru
      _
    // Predicated region
    $region50: #{tpu_custom_call.1} parent=1 // pred_check
      _
    $region51: #{tpu_custom_call.1} parent=1 // pred_check_branch
      %101 = sbr.rel (0) target = $region53
    $region52: #{tpu_custom_call.1} parent=1 // pred_region
      %102 = dma.done [#allocation12], 8192
    $region53: #{tpu_custom_call.1} parent=1 // pred_fallthru
      _
    %v104 = vld [vmem:[#allocation2] sm:$0xf]
    %v105 = vld [vmem:[#allocation5] sm:$0xff]
    %v106 = vld [vmem:[#allocation5 + $0x8] sm:$0xff]
    %v107 = vld [vmem:[#allocation5 + $0x10] sm:$0xff]
    %v108 = vld [vmem:[#allocation5 + $0x18] sm:$0xff]
    %v109 = vld [vmem:[#allocation5 + $0x20] sm:$0xff]
    %v110 = vld [vmem:[#allocation5 + $0x28] sm:$0xff]
    %v111 = vld [vmem:[#allocation5 + $0x30] sm:$0xff]
    %v112 = vld [vmem:[#allocation5 + $0x38] sm:$0xff]
    %v113 = vld [vmem:[#allocation7] sm:$0xf]
    %v115 = vlaneseq
    %v116 = vshrl.u32 %v115, 7
    %v117 = vsub.s32 0, %v116
    %v118 = vrot.slane %v113, %v117
    %v119 = vlaneseq
    %v120 = vshrl.u32 %v119, 7
    %v121 = vsub.s32 1, %v120
    %v122 = vrot.slane %v113, %v121
    %v123 = vlaneseq
    %v124 = vshrl.u32 %v123, 7
    %v125 = vsub.s32 2, %v124
    %v126 = vrot.slane %v113, %v125
    %v127 = vlaneseq
    %v128 = vshrl.u32 %v127, 7
    %v129 = vsub.s32 3, %v128
    %v130 = vrot.slane %v113, %v129
    %v143 = vunpack.c.l.b16 %v105
    %v144 = vunpack.c.h.b16 %v105
    %v145 = vunpack.c.l.b16 %v106
    %v146 = vunpack.c.h.b16 %v106
    %v147 = vunpack.c.l.b16 %v107
    %v148 = vunpack.c.h.b16 %v107
    %v149 = vunpack.c.l.b16 %v108
    %v150 = vunpack.c.h.b16 %v108
    %v151 = vunpack.c.l.b16 %v109
    %v152 = vunpack.c.h.b16 %v109
    %v153 = vunpack.c.l.b16 %v110
    %v154 = vunpack.c.h.b16 %v110
    %v155 = vunpack.c.l.b16 %v111
    %v156 = vunpack.c.h.b16 %v111
    %v157 = vunpack.c.l.b16 %v112
    %v158 = vunpack.c.h.b16 %v112
    %v159 = vpack.c.b16 %v147, %v143
    %v160 = vpack.c.b16 %v148, %v144
    %v161 = vpack.c.b16 %v149, %v145
    %v162 = vpack.c.b16 %v150, %v146
    %v163 = vpack.c.b16 %v155, %v151
    %v164 = vpack.c.b16 %v156, %v152
    %v165 = vpack.c.b16 %v157, %v153
    %v166 = vpack.c.b16 %v158, %v154
    %vm175 = vcmask 261120
    %v177 = vsel %vm175, %v104, 0
    %179 = vmatprep.subr.bf16.mxu0 0
    %180 = vmatpush1.bf16.msra.mxu0 0
    %181 = vmatprep.subr.bf16.mxu0 0
    %182 = vmatpush1.bf16.msra.mxu0 0
    %183 = vmatprep.subr.bf16.mxu0 0
    %184 = vmatpush1.bf16.msra.mxu0 0
    %185 = vmatprep.subr.bf16.mxu0 0
    %186 = vmatpush1.bf16.msra.mxu0 0
    %187 = vmatprep.subr.bf16.mxu0 0
    %188 = vmatpush1.bf16.msra.mxu0 0
    %189 = vmatprep.subr.bf16.mxu0 0
    %190 = vmatpush1.bf16.msra.mxu0 0
    %191 = vmatprep.subr.bf16.mxu0 %v164
    %192 = vmatpush1.bf16.msra.mxu0 %v163
    %193 = vmatprep.subr.bf16.mxu0 %v160
    %194 = vmatpush1.bf16.msra.mxu0 %v159
    %195 = vmatprep.subr.bf16.mxu0 0
    %196 = vmatpush2.bf16.msra.mxu0 0
    %197 = vmatprep.subr.bf16.mxu0 0
    %198 = vmatpush2.bf16.msra.mxu0 0
    %199 = vmatprep.subr.bf16.mxu0 0
    %200 = vmatpush2.bf16.msra.mxu0 0
    %201 = vmatprep.subr.bf16.mxu0 0
    %202 = vmatpush2.bf16.msra.mxu0 0
    %203 = vmatprep.subr.bf16.mxu0 0
    %204 = vmatpush2.bf16.msra.mxu0 0
    %205 = vmatprep.subr.bf16.mxu0 0
    %206 = vmatpush2.bf16.msra.mxu0 0
    %207 = vmatprep.subr.bf16.mxu0 0
    %208 = vmatpush2.bf16.msra.mxu0 0
    %209 = vmatprep.subr.bf16.mxu0 0
    %210 = vmatpush2.bf16.msra.mxu0 0
    %211 = vmatprep.mubr.bf16.mxu0 0
    %212 = vmatmul.mubr.bf16.gmra.mxu0 %v177
    %v213 = vpop.f32.mrf.mxu0
    %v214 = vadd.f32 %v118, %v213
    %v215 = vpop.f32.mrf.mxu0
    %v216 = vadd.f32 %v122, %v215
    %v217 = vpop.f32.mrf.mxu0
    %v218 = vpop.f32.mrf.mxu0
    %219 = vdwg.mxu0
    %220 = vmatprep.subr.bf16.mxu0 0
    %221 = vmatpush1.bf16.msra.mxu0 0
    %222 = vmatprep.subr.bf16.mxu0 0
    %223 = vmatpush1.bf16.msra.mxu0 0
    %224 = vmatprep.subr.bf16.mxu0 0
    %225 = vmatpush1.bf16.msra.mxu0 0
    %226 = vmatprep.subr.bf16.mxu0 0
    %227 = vmatpush1.bf16.msra.mxu0 0
    %228 = vmatprep.subr.bf16.mxu0 0
    %229 = vmatpush1.bf16.msra.mxu0 0
    %230 = vmatprep.subr.bf16.mxu0 0
    %231 = vmatpush1.bf16.msra.mxu0 0
    %232 = vmatprep.subr.bf16.mxu0 %v166
    %233 = vmatpush1.bf16.msra.mxu0 %v165
    %234 = vmatprep.subr.bf16.mxu0 %v162
    %235 = vmatpush1.bf16.msra.mxu0 %v161
    %236 = vmatprep.subr.bf16.mxu0 0
    %237 = vmatpush2.bf16.msra.mxu0 0
    %238 = vmatprep.subr.bf16.mxu0 0
    %239 = vmatpush2.bf16.msra.mxu0 0
    %240 = vmatprep.subr.bf16.mxu0 0
    %241 = vmatpush2.bf16.msra.mxu0 0
    %242 = vmatprep.subr.bf16.mxu0 0
    %243 = vmatpush2.bf16.msra.mxu0 0
    %244 = vmatprep.subr.bf16.mxu0 0
    %245 = vmatpush2.bf16.msra.mxu0 0
    %246 = vmatprep.subr.bf16.mxu0 0
    %247 = vmatpush2.bf16.msra.mxu0 0
    %248 = vmatprep.subr.bf16.mxu0 0
    %249 = vmatpush2.bf16.msra.mxu0 0
    %250 = vmatprep.subr.bf16.mxu0 0
    %251 = vmatpush2.bf16.msra.mxu0 0
    %252 = vmatprep.mubr.bf16.mxu0 0
    %253 = vmatmul.mubr.bf16.gmra.mxu0 %v177
    %v254 = vpop.f32.mrf.mxu0
    %v255 = vadd.f32 %v126, %v254
    %v256 = vpop.f32.mrf.mxu0
    %v257 = vadd.f32 %v130, %v256
    %v258 = vpop.f32.mrf.mxu0
    %v259 = vpop.f32.mrf.mxu0
    %260 = vdwg.mxu0
    %vm261 = vcmp.ge.f32.partialorder %v214, 0.0
    %vm262 = vcmp.ge.f32.partialorder %v216, 0.0
    %vm263 = vcmp.ge.f32.partialorder %v255, 0.0
    %vm264 = vcmp.ge.f32.partialorder %v257, 0.0
    %v265 = vmul.f32 %v214, 0.01
    %v266 = vmul.f32 %v216, 0.01
    %v267 = vmul.f32 %v255, 0.01
    %v268 = vmul.f32 %v257, 0.01
    %v269 = vsel %vm261, %v214, %v265
    %v270 = vsel %vm262, %v216, %v266
    %v271 = vsel %vm263, %v255, %v267
    %v272 = vsel %vm264, %v257, %v268
    %v273 = vpack.c.bf16 %v269, %v269
    %v274 = vpack.c.bf16 %v270, %v270
    %v275 = vpack.c.bf16 %v271, %v271
    %v276 = vpack.c.bf16 %v272, %v272
    %v277 = vld [vmem:[#allocation8] sm:$0xff]
    %v278 = vld [vmem:[#allocation8 + $0x8] sm:$0xff]
    %v279 = vld [vmem:[#allocation8 + $0x10] sm:$0xff]
    %v280 = vld [vmem:[#allocation8 + $0x18] sm:$0xff]
    %v281 = vld [vmem:[#allocation8 + $0x20] sm:$0xff]
    %v282 = vld [vmem:[#allocation8 + $0x28] sm:$0xff]
    %v283 = vld [vmem:[#allocation8 + $0x30] sm:$0xff]
    %v284 = vld [vmem:[#allocation8 + $0x38] sm:$0xff]
    %v285 = vld [vmem:[#allocation8 + $0x40] sm:$0xff]
    %v286 = vld [vmem:[#allocation8 + $0x48] sm:$0xff]
    %v287 = vld [vmem:[#allocation8 + $0x50] sm:$0xff]
    %v288 = vld [vmem:[#allocation8 + $0x58] sm:$0xff]
    %v289 = vld [vmem:[#allocation8 + $0x60] sm:$0xff]
    %v290 = vld [vmem:[#allocation8 + $0x68] sm:$0xff]
    %v291 = vld [vmem:[#allocation8 + $0x70] sm:$0xff]
    %v292 = vld [vmem:[#allocation8 + $0x78] sm:$0xff]
    %v293 = vld [vmem:[#allocation8 + $0x80] sm:$0xff]
    %v294 = vld [vmem:[#allocation8 + $0x88] sm:$0xff]
    %v295 = vld [vmem:[#allocation8 + $0x90] sm:$0xff]
    %v296 = vld [vmem:[#allocation8 + $0x98] sm:$0xff]
    %v297 = vld [vmem:[#allocation8 + $0xa0] sm:$0xff]
    %v298 = vld [vmem:[#allocation8 + $0xa8] sm:$0xff]
    %v299 = vld [vmem:[#allocation8 + $0xb0] sm:$0xff]
    %v300 = vld [vmem:[#allocation8 + $0xb8] sm:$0xff]
    %v301 = vld [vmem:[#allocation8 + $0xc0] sm:$0xff]
    %v302 = vld [vmem:[#allocation8 + $0xc8] sm:$0xff]
    %v303 = vld [vmem:[#allocation8 + $0xd0] sm:$0xff]
    %v304 = vld [vmem:[#allocation8 + $0xd8] sm:$0xff]
    %v305 = vld [vmem:[#allocation8 + $0xe0] sm:$0xff]
    %v306 = vld [vmem:[#allocation8 + $0xe8] sm:$0xff]
    %v307 = vld [vmem:[#allocation8 + $0xf0] sm:$0xff]
    %v308 = vld [vmem:[#allocation8 + $0xf8] sm:$0xff]
    %v309 = vld [vmem:[#allocation8 + $0x100] sm:$0xff]
    %v310 = vld [vmem:[#allocation8 + $0x108] sm:$0xff]
    %v311 = vld [vmem:[#allocation8 + $0x110] sm:$0xff]
    %v312 = vld [vmem:[#allocation8 + $0x118] sm:$0xff]
    %v313 = vld [vmem:[#allocation8 + $0x120] sm:$0xff]
    %v314 = vld [vmem:[#allocation8 + $0x128] sm:$0xff]
    %v315 = vld [vmem:[#allocation8 + $0x130] sm:$0xff]
    %v316 = vld [vmem:[#allocation8 + $0x138] sm:$0xff]
    %v317 = vld [vmem:[#allocation8 + $0x140] sm:$0xff]
    %v318 = vld [vmem:[#allocation8 + $0x148] sm:$0xff]
    %v319 = vld [vmem:[#allocation8 + $0x150] sm:$0xff]
    %v320 = vld [vmem:[#allocation8 + $0x158] sm:$0xff]
    %v321 = vld [vmem:[#allocation8 + $0x160] sm:$0xff]
    %v322 = vld [vmem:[#allocation8 + $0x168] sm:$0xff]
    %v323 = vld [vmem:[#allocation8 + $0x170] sm:$0xff]
    %v324 = vld [vmem:[#allocation8 + $0x178] sm:$0xff]
    %v325 = vld [vmem:[#allocation8 + $0x180] sm:$0xff]
    %v326 = vld [vmem:[#allocation8 + $0x188] sm:$0xff]
    %v327 = vld [vmem:[#allocation8 + $0x190] sm:$0xff]
    %v328 = vld [vmem:[#allocation8 + $0x198] sm:$0xff]
    %v329 = vld [vmem:[#allocation8 + $0x1a0] sm:$0xff]
    %v330 = vld [vmem:[#allocation8 + $0x1a8] sm:$0xff]
    %v331 = vld [vmem:[#allocation8 + $0x1b0] sm:$0xff]
    %v332 = vld [vmem:[#allocation8 + $0x1b8] sm:$0xff]
    %v333 = vld [vmem:[#allocation8 + $0x1c0] sm:$0xff]
    %v334 = vld [vmem:[#allocation8 + $0x1c8] sm:$0xff]
    %v335 = vld [vmem:[#allocation8 + $0x1d0] sm:$0xff]
    %v336 = vld [vmem:[#allocation8 + $0x1d8] sm:$0xff]
    %v337 = vld [vmem:[#allocation8 + $0x1e0] sm:$0xff]
    %v338 = vld [vmem:[#allocation8 + $0x1e8] sm:$0xff]
    %v339 = vld [vmem:[#allocation8 + $0x1f0] sm:$0xff]
    %v340 = vld [vmem:[#allocation8 + $0x1f8] sm:$0xff]
    %v341 = vld [vmem:[#allocation8 + $0x200] sm:$0xff]
    %v342 = vld [vmem:[#allocation8 + $0x208] sm:$0xff]
    %v343 = vld [vmem:[#allocation8 + $0x210] sm:$0xff]
    %v344 = vld [vmem:[#allocation8 + $0x218] sm:$0xff]
    %v345 = vld [vmem:[#allocation8 + $0x220] sm:$0xff]
    %v346 = vld [vmem:[#allocation8 + $0x228] sm:$0xff]
    %v347 = vld [vmem:[#allocation8 + $0x230] sm:$0xff]
    %v348 = vld [vmem:[#allocation8 + $0x238] sm:$0xff]
    %v349 = vld [vmem:[#allocation8 + $0x240] sm:$0xff]
    %v350 = vld [vmem:[#allocation8 + $0x248] sm:$0xff]
    %v351 = vld [vmem:[#allocation8 + $0x250] sm:$0xff]
    %v352 = vld [vmem:[#allocation8 + $0x258] sm:$0xff]
    %v353 = vld [vmem:[#allocation8 + $0x260] sm:$0xff]
    %v354 = vld [vmem:[#allocation8 + $0x268] sm:$0xff]
    %v355 = vld [vmem:[#allocation8 + $0x270] sm:$0xff]
    %v356 = vld [vmem:[#allocation8 + $0x278] sm:$0xff]
    %v357 = vld [vmem:[#allocation8 + $0x280] sm:$0xff]
    %v358 = vld [vmem:[#allocation8 + $0x288] sm:$0xff]
    %v359 = vld [vmem:[#allocation8 + $0x290] sm:$0xff]
    %v360 = vld [vmem:[#allocation8 + $0x298] sm:$0xff]
    %v361 = vld [vmem:[#allocation8 + $0x2a0] sm:$0xff]
    %v362 = vld [vmem:[#allocation8 + $0x2a8] sm:$0xff]
    %v363 = vld [vmem:[#allocation8 + $0x2b0] sm:$0xff]
    %v364 = vld [vmem:[#allocation8 + $0x2b8] sm:$0xff]
    %v365 = vld [vmem:[#allocation8 + $0x2c0] sm:$0xff]
    %v366 = vld [vmem:[#allocation8 + $0x2c8] sm:$0xff]
    %v367 = vld [vmem:[#allocation8 + $0x2d0] sm:$0xff]
    %v368 = vld [vmem:[#allocation8 + $0x2d8] sm:$0xff]
    %v369 = vld [vmem:[#allocation8 + $0x2e0] sm:$0xff]
    %v370 = vld [vmem:[#allocation8 + $0x2e8] sm:$0xff]
    %v371 = vld [vmem:[#allocation8 + $0x2f0] sm:$0xff]
    %v372 = vld [vmem:[#allocation8 + $0x2f8] sm:$0xff]
    %v373 = vld [vmem:[#allocation8 + $0x300] sm:$0xff]
    %v374 = vld [vmem:[#allocation8 + $0x308] sm:$0xff]
    %v375 = vld [vmem:[#allocation8 + $0x310] sm:$0xff]
    %v376 = vld [vmem:[#allocation8 + $0x318] sm:$0xff]
    %v377 = vld [vmem:[#allocation8 + $0x320] sm:$0xff]
    %v378 = vld [vmem:[#allocation8 + $0x328] sm:$0xff]
    %v379 = vld [vmem:[#allocation8 + $0x330] sm:$0xff]
    %v380 = vld [vmem:[#allocation8 + $0x338] sm:$0xff]
    %v381 = vld [vmem:[#allocation8 + $0x340] sm:$0xff]
    %v382 = vld [vmem:[#allocation8 + $0x348] sm:$0xff]
    %v383 = vld [vmem:[#allocation8 + $0x350] sm:$0xff]
    %v384 = vld [vmem:[#allocation8 + $0x358] sm:$0xff]
    %v385 = vld [vmem:[#allocation8 + $0x360] sm:$0xff]
    %v386 = vld [vmem:[#allocation8 + $0x368] sm:$0xff]
    %v387 = vld [vmem:[#allocation8 + $0x370] sm:$0xff]
    %v388 = vld [vmem:[#allocation8 + $0x378] sm:$0xff]
    %v389 = vld [vmem:[#allocation8 + $0x380] sm:$0xff]
    %v390 = vld [vmem:[#allocation8 + $0x388] sm:$0xff]
    %v391 = vld [vmem:[#allocation8 + $0x390] sm:$0xff]
    %v392 = vld [vmem:[#allocation8 + $0x398] sm:$0xff]
    %v393 = vld [vmem:[#allocation8 + $0x3a0] sm:$0xff]
    %v394 = vld [vmem:[#allocation8 + $0x3a8] sm:$0xff]
    %v395 = vld [vmem:[#allocation8 + $0x3b0] sm:$0xff]
    %v396 = vld [vmem:[#allocation8 + $0x3b8] sm:$0xff]
    %v397 = vld [vmem:[#allocation8 + $0x3c0] sm:$0xff]
    %v398 = vld [vmem:[#allocation8 + $0x3c8] sm:$0xff]
    %v399 = vld [vmem:[#allocation8 + $0x3d0] sm:$0xff]
    %v400 = vld [vmem:[#allocation8 + $0x3d8] sm:$0xff]
    %v401 = vld [vmem:[#allocation8 + $0x3e0] sm:$0xff]
    %v402 = vld [vmem:[#allocation8 + $0x3e8] sm:$0xff]
    %v403 = vld [vmem:[#allocation8 + $0x3f0] sm:$0xff]
    %v404 = vld [vmem:[#allocation8 + $0x3f8] sm:$0xff]
    %v405 = vld [vmem:[#allocation8 + $0x400] sm:$0xff]
    %v406 = vld [vmem:[#allocation8 + $0x408] sm:$0xff]
    %v407 = vld [vmem:[#allocation8 + $0x410] sm:$0xff]
    %v408 = vld [vmem:[#allocation8 + $0x418] sm:$0xff]
    %v409 = vld [vmem:[#allocation8 + $0x420] sm:$0xff]
    %v410 = vld [vmem:[#allocation8 + $0x428] sm:$0xff]
    %v411 = vld [vmem:[#allocation8 + $0x430] sm:$0xff]
    %v412 = vld [vmem:[#allocation8 + $0x438] sm:$0xff]
    %v413 = vld [vmem:[#allocation8 + $0x440] sm:$0xff]
    %v414 = vld [vmem:[#allocation8 + $0x448] sm:$0xff]
    %v415 = vld [vmem:[#allocation8 + $0x450] sm:$0xff]
    %v416 = vld [vmem:[#allocation8 + $0x458] sm:$0xff]
    %v417 = vld [vmem:[#allocation8 + $0x460] sm:$0xff]
    %v418 = vld [vmem:[#allocation8 + $0x468] sm:$0xff]
    %v419 = vld [vmem:[#allocation8 + $0x470] sm:$0xff]
    %v420 = vld [vmem:[#allocation8 + $0x478] sm:$0xff]
    %v421 = vld [vmem:[#allocation8 + $0x480] sm:$0xff]
    %v422 = vld [vmem:[#allocation8 + $0x488] sm:$0xff]
    %v423 = vld [vmem:[#allocation8 + $0x490] sm:$0xff]
    %v424 = vld [vmem:[#allocation8 + $0x498] sm:$0xff]
    %v425 = vld [vmem:[#allocation8 + $0x4a0] sm:$0xff]
    %v426 = vld [vmem:[#allocation8 + $0x4a8] sm:$0xff]
    %v427 = vld [vmem:[#allocation8 + $0x4b0] sm:$0xff]
    %v428 = vld [vmem:[#allocation8 + $0x4b8] sm:$0xff]
    %v429 = vld [vmem:[#allocation8 + $0x4c0] sm:$0xff]
    %v430 = vld [vmem:[#allocation8 + $0x4c8] sm:$0xff]
    %v431 = vld [vmem:[#allocation8 + $0x4d0] sm:$0xff]
    %v432 = vld [vmem:[#allocation8 + $0x4d8] sm:$0xff]
    %v433 = vld [vmem:[#allocation8 + $0x4e0] sm:$0xff]
    %v434 = vld [vmem:[#allocation8 + $0x4e8] sm:$0xff]
    %v435 = vld [vmem:[#allocation8 + $0x4f0] sm:$0xff]
    %v436 = vld [vmem:[#allocation8 + $0x4f8] sm:$0xff]
    %v437 = vld [vmem:[#allocation8 + $0x500] sm:$0xff]
    %v438 = vld [vmem:[#allocation8 + $0x508] sm:$0xff]
    %v439 = vld [vmem:[#allocation8 + $0x510] sm:$0xff]
    %v440 = vld [vmem:[#allocation8 + $0x518] sm:$0xff]
    %v441 = vld [vmem:[#allocation8 + $0x520] sm:$0xff]
    %v442 = vld [vmem:[#allocation8 + $0x528] sm:$0xff]
    %v443 = vld [vmem:[#allocation8 + $0x530] sm:$0xff]
    %v444 = vld [vmem:[#allocation8 + $0x538] sm:$0xff]
    %v445 = vld [vmem:[#allocation8 + $0x540] sm:$0xff]
    %v446 = vld [vmem:[#allocation8 + $0x548] sm:$0xff]
    %v447 = vld [vmem:[#allocation8 + $0x550] sm:$0xff]
    %v448 = vld [vmem:[#allocation8 + $0x558] sm:$0xff]
    %v449 = vld [vmem:[#allocation8 + $0x560] sm:$0xff]
    %v450 = vld [vmem:[#allocation8 + $0x568] sm:$0xff]
    %v451 = vld [vmem:[#allocation8 + $0x570] sm:$0xff]
    %v452 = vld [vmem:[#allocation8 + $0x578] sm:$0xff]
    %v453 = vld [vmem:[#allocation8 + $0x580] sm:$0xff]
    %v454 = vld [vmem:[#allocation8 + $0x588] sm:$0xff]
    %v455 = vld [vmem:[#allocation8 + $0x590] sm:$0xff]
    %v456 = vld [vmem:[#allocation8 + $0x598] sm:$0xff]
    %v457 = vld [vmem:[#allocation8 + $0x5a0] sm:$0xff]
    %v458 = vld [vmem:[#allocation8 + $0x5a8] sm:$0xff]
    %v459 = vld [vmem:[#allocation8 + $0x5b0] sm:$0xff]
    %v460 = vld [vmem:[#allocation8 + $0x5b8] sm:$0xff]
    %v461 = vld [vmem:[#allocation8 + $0x5c0] sm:$0xff]
    %v462 = vld [vmem:[#allocation8 + $0x5c8] sm:$0xff]
    %v463 = vld [vmem:[#allocation8 + $0x5d0] sm:$0xff]
    %v464 = vld [vmem:[#allocation8 + $0x5d8] sm:$0xff]
    %v465 = vld [vmem:[#allocation8 + $0x5e0] sm:$0xff]
    %v466 = vld [vmem:[#allocation8 + $0x5e8] sm:$0xff]
    %v467 = vld [vmem:[#allocation8 + $0x5f0] sm:$0xff]
    %v468 = vld [vmem:[#allocation8 + $0x5f8] sm:$0xff]
    %v469 = vld [vmem:[#allocation8 + $0x600] sm:$0xff]
    %v470 = vld [vmem:[#allocation8 + $0x608] sm:$0xff]
    %v471 = vld [vmem:[#allocation8 + $0x610] sm:$0xff]
    %v472 = vld [vmem:[#allocation8 + $0x618] sm:$0xff]
    %v473 = vld [vmem:[#allocation8 + $0x620] sm:$0xff]
    %v474 = vld [vmem:[#allocation8 + $0x628] sm:$0xff]
    %v475 = vld [vmem:[#allocation8 + $0x630] sm:$0xff]
    %v476 = vld [vmem:[#allocation8 + $0x638] sm:$0xff]
    %v477 = vld [vmem:[#allocation8 + $0x640] sm:$0xff]
    %v478 = vld [vmem:[#allocation8 + $0x648] sm:$0xff]
    %v479 = vld [vmem:[#allocation8 + $0x650] sm:$0xff]
    %v480 = vld [vmem:[#allocation8 + $0x658] sm:$0xff]
    %v481 = vld [vmem:[#allocation8 + $0x660] sm:$0xff]
    %v482 = vld [vmem:[#allocation8 + $0x668] sm:$0xff]
    %v483 = vld [vmem:[#allocation8 + $0x670] sm:$0xff]
    %v484 = vld [vmem:[#allocation8 + $0x678] sm:$0xff]
    %v485 = vld [vmem:[#allocation8 + $0x680] sm:$0xff]
    %v486 = vld [vmem:[#allocation8 + $0x688] sm:$0xff]
    %v487 = vld [vmem:[#allocation8 + $0x690] sm:$0xff]
    %v488 = vld [vmem:[#allocation8 + $0x698] sm:$0xff]
    %v489 = vld [vmem:[#allocation8 + $0x6a0] sm:$0xff]
    %v490 = vld [vmem:[#allocation8 + $0x6a8] sm:$0xff]
    %v491 = vld [vmem:[#allocation8 + $0x6b0] sm:$0xff]
    %v492 = vld [vmem:[#allocation8 + $0x6b8] sm:$0xff]
    %v493 = vld [vmem:[#allocation8 + $0x6c0] sm:$0xff]
    %v494 = vld [vmem:[#allocation8 + $0x6c8] sm:$0xff]
    %v495 = vld [vmem:[#allocation8 + $0x6d0] sm:$0xff]
    %v496 = vld [vmem:[#allocation8 + $0x6d8] sm:$0xff]
    %v497 = vld [vmem:[#allocation8 + $0x6e0] sm:$0xff]
    %v498 = vld [vmem:[#allocation8 + $0x6e8] sm:$0xff]
    %v499 = vld [vmem:[#allocation8 + $0x6f0] sm:$0xff]
    %v500 = vld [vmem:[#allocation8 + $0x6f8] sm:$0xff]
    %v501 = vld [vmem:[#allocation8 + $0x700] sm:$0xff]
    %v502 = vld [vmem:[#allocation8 + $0x708] sm:$0xff]
    %v503 = vld [vmem:[#allocation8 + $0x710] sm:$0xff]
    %v504 = vld [vmem:[#allocation8 + $0x718] sm:$0xff]
    %v505 = vld [vmem:[#allocation8 + $0x720] sm:$0xff]
    %v506 = vld [vmem:[#allocation8 + $0x728] sm:$0xff]
    %v507 = vld [vmem:[#allocation8 + $0x730] sm:$0xff]
    %v508 = vld [vmem:[#allocation8 + $0x738] sm:$0xff]
    %v509 = vld [vmem:[#allocation8 + $0x740] sm:$0xff]
    %v510 = vld [vmem:[#allocation8 + $0x748] sm:$0xff]
    %v511 = vld [vmem:[#allocation8 + $0x750] sm:$0xff]
    %v512 = vld [vmem:[#allocation8 + $0x758] sm:$0xff]
    %v513 = vld [vmem:[#allocation8 + $0x760] sm:$0xff]
    %v514 = vld [vmem:[#allocation8 + $0x768] sm:$0xff]
    %v515 = vld [vmem:[#allocation8 + $0x770] sm:$0xff]
    %v516 = vld [vmem:[#allocation8 + $0x778] sm:$0xff]
    %v517 = vld [vmem:[#allocation8 + $0x780] sm:$0xff]
    %v518 = vld [vmem:[#allocation8 + $0x788] sm:$0xff]
    %v519 = vld [vmem:[#allocation8 + $0x790] sm:$0xff]
    %v520 = vld [vmem:[#allocation8 + $0x798] sm:$0xff]
    %v521 = vld [vmem:[#allocation8 + $0x7a0] sm:$0xff]
    %v522 = vld [vmem:[#allocation8 + $0x7a8] sm:$0xff]
    %v523 = vld [vmem:[#allocation8 + $0x7b0] sm:$0xff]
    %v524 = vld [vmem:[#allocation8 + $0x7b8] sm:$0xff]
    %v525 = vld [vmem:[#allocation8 + $0x7c0] sm:$0xff]
    %v526 = vld [vmem:[#allocation8 + $0x7c8] sm:$0xff]
    %v527 = vld [vmem:[#allocation8 + $0x7d0] sm:$0xff]
    %v528 = vld [vmem:[#allocation8 + $0x7d8] sm:$0xff]
    %v529 = vld [vmem:[#allocation8 + $0x7e0] sm:$0xff]
    %v530 = vld [vmem:[#allocation8 + $0x7e8] sm:$0xff]
    %v531 = vld [vmem:[#allocation8 + $0x7f0] sm:$0xff]
    %v532 = vld [vmem:[#allocation8 + $0x7f8] sm:$0xff]
    %v533 = vld [vmem:[#allocation10] sm:$0xff]
    %v535 = vlaneseq
    %v536 = vshrl.u32 %v535, 7
    %v537 = vsub.s32 0, %v536
    %v538 = vrot.slane %v533, %v537
    %v539 = vlaneseq
    %v540 = vshrl.u32 %v539, 7
    %v541 = vsub.s32 1, %v540
    %v542 = vrot.slane %v533, %v541
    %v543 = vlaneseq
    %v544 = vshrl.u32 %v543, 7
    %v545 = vsub.s32 2, %v544
    %v546 = vrot.slane %v533, %v545
    %v547 = vlaneseq
    %v548 = vshrl.u32 %v547, 7
    %v549 = vsub.s32 3, %v548
    %v550 = vrot.slane %v533, %v549
    %v551 = vlaneseq
    %v552 = vshrl.u32 %v551, 7
    %v553 = vsub.s32 4, %v552
    %v554 = vrot.slane %v533, %v553
    %v555 = vlaneseq
    %v556 = vshrl.u32 %v555, 7
    %v557 = vsub.s32 5, %v556
    %v558 = vrot.slane %v533, %v557
    %v559 = vlaneseq
    %v560 = vshrl.u32 %v559, 7
    %v561 = vsub.s32 6, %v560
    %v562 = vrot.slane %v533, %v561
    %v563 = vlaneseq
    %v564 = vshrl.u32 %v563, 7
    %v565 = vsub.s32 7, %v564
    %v566 = vrot.slane %v533, %v565
    %v831 = vunpack.c.l.b16 %v277
    %v832 = vunpack.c.h.b16 %v277
    %v833 = vunpack.c.l.b16 %v278
    %v834 = vunpack.c.h.b16 %v278
    %v835 = vunpack.c.l.b16 %v279
    %v836 = vunpack.c.h.b16 %v279
    %v837 = vunpack.c.l.b16 %v280
    %v838 = vunpack.c.h.b16 %v280
    %v839 = vunpack.c.l.b16 %v281
    %v840 = vunpack.c.h.b16 %v281
    %v841 = vunpack.c.l.b16 %v282
    %v842 = vunpack.c.h.b16 %v282
    %v843 = vunpack.c.l.b16 %v283
    %v844 = vunpack.c.h.b16 %v283
    %v845 = vunpack.c.l.b16 %v284
    %v846 = vunpack.c.h.b16 %v284
    %v847 = vunpack.c.l.b16 %v285
    %v848 = vunpack.c.h.b16 %v285
    %v849 = vunpack.c.l.b16 %v286
    %v850 = vunpack.c.h.b16 %v286
    %v851 = vunpack.c.l.b16 %v287
    %v852 = vunpack.c.h.b16 %v287
    %v853 = vunpack.c.l.b16 %v288
    %v854 = vunpack.c.h.b16 %v288
    %v855 = vunpack.c.l.b16 %v289
    %v856 = vunpack.c.h.b16 %v289
    %v857 = vunpack.c.l.b16 %v290
    %v858 = vunpack.c.h.b16 %v290
    %v859 = vunpack.c.l.b16 %v291
    %v860 = vunpack.c.h.b16 %v291
    %v861 = vunpack.c.l.b16 %v292
    %v862 = vunpack.c.h.b16 %v292
    %v863 = vunpack.c.l.b16 %v293
    %v864 = vunpack.c.h.b16 %v293
    %v865 = vunpack.c.l.b16 %v294
    %v866 = vunpack.c.h.b16 %v294
    %v867 = vunpack.c.l.b16 %v295
    %v868 = vunpack.c.h.b16 %v295
    %v869 = vunpack.c.l.b16 %v296
    %v870 = vunpack.c.h.b16 %v296
    %v871 = vunpack.c.l.b16 %v297
    %v872 = vunpack.c.h.b16 %v297
    %v873 = vunpack.c.l.b16 %v298
    %v874 = vunpack.c.h.b16 %v298
    %v875 = vunpack.c.l.b16 %v299
    %v876 = vunpack.c.h.b16 %v299
    %v877 = vunpack.c.l.b16 %v300
    %v878 = vunpack.c.h.b16 %v300
    %v879 = vunpack.c.l.b16 %v301
    %v880 = vunpack.c.h.b16 %v301
    %v881 = vunpack.c.l.b16 %v302
    %v882 = vunpack.c.h.b16 %v302
    %v883 = vunpack.c.l.b16 %v303
    %v884 = vunpack.c.h.b16 %v303
    %v885 = vunpack.c.l.b16 %v304
    %v886 = vunpack.c.h.b16 %v304
    %v887 = vunpack.c.l.b16 %v305
    %v888 = vunpack.c.h.b16 %v305
    %v889 = vunpack.c.l.b16 %v306
    %v890 = vunpack.c.h.b16 %v306
    %v891 = vunpack.c.l.b16 %v307
    %v892 = vunpack.c.h.b16 %v307
    %v893 = vunpack.c.l.b16 %v308
    %v894 = vunpack.c.h.b16 %v308
    %v895 = vunpack.c.l.b16 %v309
    %v896 = vunpack.c.h.b16 %v309
    %v897 = vunpack.c.l.b16 %v310
    %v898 = vunpack.c.h.b16 %v310
    %v899 = vunpack.c.l.b16 %v311
    %v900 = vunpack.c.h.b16 %v311
    %v901 = vunpack.c.l.b16 %v312
    %v902 = vunpack.c.h.b16 %v312
    %v903 = vunpack.c.l.b16 %v313
    %v904 = vunpack.c.h.b16 %v313
    %v905 = vunpack.c.l.b16 %v314
    %v906 = vunpack.c.h.b16 %v314
    %v907 = vunpack.c.l.b16 %v315
    %v908 = vunpack.c.h.b16 %v315
    %v909 = vunpack.c.l.b16 %v316
    %v910 = vunpack.c.h.b16 %v316
    %v911 = vunpack.c.l.b16 %v317
    %v912 = vunpack.c.h.b16 %v317
    %v913 = vunpack.c.l.b16 %v318
    %v914 = vunpack.c.h.b16 %v318
    %v915 = vunpack.c.l.b16 %v319
    %v916 = vunpack.c.h.b16 %v319
    %v917 = vunpack.c.l.b16 %v320
    %v918 = vunpack.c.h.b16 %v320
    %v919 = vunpack.c.l.b16 %v321
    %v920 = vunpack.c.h.b16 %v321
    %v921 = vunpack.c.l.b16 %v322
    %v922 = vunpack.c.h.b16 %v322
    %v923 = vunpack.c.l.b16 %v323
    %v924 = vunpack.c.h.b16 %v323
    %v925 = vunpack.c.l.b16 %v324
    %v926 = vunpack.c.h.b16 %v324
    %v927 = vunpack.c.l.b16 %v325
    %v928 = vunpack.c.h.b16 %v325
    %v929 = vunpack.c.l.b16 %v326
    %v930 = vunpack.c.h.b16 %v326
    %v931 = vunpack.c.l.b16 %v327
    %v932 = vunpack.c.h.b16 %v327
    %v933 = vunpack.c.l.b16 %v328
    %v934 = vunpack.c.h.b16 %v328
    %v935 = vunpack.c.l.b16 %v329
    %v936 = vunpack.c.h.b16 %v329
    %v937 = vunpack.c.l.b16 %v330
    %v938 = vunpack.c.h.b16 %v330
    %v939 = vunpack.c.l.b16 %v331
    %v940 = vunpack.c.h.b16 %v331
    %v941 = vunpack.c.l.b16 %v332
    %v942 = vunpack.c.h.b16 %v332
    %v943 = vunpack.c.l.b16 %v333
    %v944 = vunpack.c.h.b16 %v333
    %v945 = vunpack.c.l.b16 %v334
    %v946 = vunpack.c.h.b16 %v334
    %v947 = vunpack.c.l.b16 %v335
    %v948 = vunpack.c.h.b16 %v335
    %v949 = vunpack.c.l.b16 %v336
    %v950 = vunpack.c.h.b16 %v336
    %v951 = vunpack.c.l.b16 %v337
    %v952 = vunpack.c.h.b16 %v337
    %v953 = vunpack.c.l.b16 %v338
    %v954 = vunpack.c.h.b16 %v338
    %v955 = vunpack.c.l.b16 %v339
    %v956 = vunpack.c.h.b16 %v339
    %v957 = vunpack.c.l.b16 %v340
    %v958 = vunpack.c.h.b16 %v340
    %v959 = vunpack.c.l.b16 %v341
    %v960 = vunpack.c.h.b16 %v341
    %v961 = vunpack.c.l.b16 %v342
    %v962 = vunpack.c.h.b16 %v342
    %v963 = vunpack.c.l.b16 %v343
    %v964 = vunpack.c.h.b16 %v343
    %v965 = vunpack.c.l.b16 %v344
    %v966 = vunpack.c.h.b16 %v344
    %v967 = vunpack.c.l.b16 %v345
    %v968 = vunpack.c.h.b16 %v345
    %v969 = vunpack.c.l.b16 %v346
    %v970 = vunpack.c.h.b16 %v346
    %v971 = vunpack.c.l.b16 %v347
    %v972 = vunpack.c.h.b16 %v347
    %v973 = vunpack.c.l.b16 %v348
    %v974 = vunpack.c.h.b16 %v348
    %v975 = vunpack.c.l.b16 %v349
    %v976 = vunpack.c.h.b16 %v349
    %v977 = vunpack.c.l.b16 %v350
    %v978 = vunpack.c.h.b16 %v350
    %v979 = vunpack.c.l.b16 %v351
    %v980 = vunpack.c.h.b16 %v351
    %v981 = vunpack.c.l.b16 %v352
    %v982 = vunpack.c.h.b16 %v352
    %v983 = vunpack.c.l.b16 %v353
    %v984 = vunpack.c.h.b16 %v353
    %v985 = vunpack.c.l.b16 %v354
    %v986 = vunpack.c.h.b16 %v354
    %v987 = vunpack.c.l.b16 %v355
    %v988 = vunpack.c.h.b16 %v355
    %v989 = vunpack.c.l.b16 %v356
    %v990 = vunpack.c.h.b16 %v356
    %v991 = vunpack.c.l.b16 %v357
    %v992 = vunpack.c.h.b16 %v357
    %v993 = vunpack.c.l.b16 %v358
    %v994 = vunpack.c.h.b16 %v358
    %v995 = vunpack.c.l.b16 %v359
    %v996 = vunpack.c.h.b16 %v359
    %v997 = vunpack.c.l.b16 %v360
    %v998 = vunpack.c.h.b16 %v360
    %v999 = vunpack.c.l.b16 %v361
    %v1000 = vunpack.c.h.b16 %v361
    %v1001 = vunpack.c.l.b16 %v362
    %v1002 = vunpack.c.h.b16 %v362
    %v1003 = vunpack.c.l.b16 %v363
    %v1004 = vunpack.c.h.b16 %v363
    %v1005 = vunpack.c.l.b16 %v364
    %v1006 = vunpack.c.h.b16 %v364
    %v1007 = vunpack.c.l.b16 %v365
    %v1008 = vunpack.c.h.b16 %v365
    %v1009 = vunpack.c.l.b16 %v366
    %v1010 = vunpack.c.h.b16 %v366
    %v1011 = vunpack.c.l.b16 %v367
    %v1012 = vunpack.c.h.b16 %v367
    %v1013 = vunpack.c.l.b16 %v368
    %v1014 = vunpack.c.h.b16 %v368
    %v1015 = vunpack.c.l.b16 %v369
    %v1016 = vunpack.c.h.b16 %v369
    %v1017 = vunpack.c.l.b16 %v370
    %v1018 = vunpack.c.h.b16 %v370
    %v1019 = vunpack.c.l.b16 %v371
    %v1020 = vunpack.c.h.b16 %v371
    %v1021 = vunpack.c.l.b16 %v372
    %v1022 = vunpack.c.h.b16 %v372
    %v1023 = vunpack.c.l.b16 %v373
    %v1024 = vunpack.c.h.b16 %v373
    %v1025 = vunpack.c.l.b16 %v374
    %v1026 = vunpack.c.h.b16 %v374
    %v1027 = vunpack.c.l.b16 %v375
    %v1028 = vunpack.c.h.b16 %v375
    %v1029 = vunpack.c.l.b16 %v376
    %v1030 = vunpack.c.h.b16 %v376
    %v1031 = vunpack.c.l.b16 %v377
    %v1032 = vunpack.c.h.b16 %v377
    %v1033 = vunpack.c.l.b16 %v378
    %v1034 = vunpack.c.h.b16 %v378
    %v1035 = vunpack.c.l.b16 %v379
    %v1036 = vunpack.c.h.b16 %v379
    %v1037 = vunpack.c.l.b16 %v380
    %v1038 = vunpack.c.h.b16 %v380
    %v1039 = vunpack.c.l.b16 %v381
    %v1040 = vunpack.c.h.b16 %v381
    %v1041 = vunpack.c.l.b16 %v382
    %v1042 = vunpack.c.h.b16 %v382
    %v1043 = vunpack.c.l.b16 %v383
    %v1044 = vunpack.c.h.b16 %v383
    %v1045 = vunpack.c.l.b16 %v384
    %v1046 = vunpack.c.h.b16 %v384
    %v1047 = vunpack.c.l.b16 %v385
    %v1048 = vunpack.c.h.b16 %v385
    %v1049 = vunpack.c.l.b16 %v386
    %v1050 = vunpack.c.h.b16 %v386
    %v1051 = vunpack.c.l.b16 %v387
    %v1052 = vunpack.c.h.b16 %v387
    %v1053 = vunpack.c.l.b16 %v388
    %v1054 = vunpack.c.h.b16 %v388
    %v1055 = vunpack.c.l.b16 %v389
    %v1056 = vunpack.c.h.b16 %v389
    %v1057 = vunpack.c.l.b16 %v390
    %v1058 = vunpack.c.h.b16 %v390
    %v1059 = vunpack.c.l.b16 %v391
    %v1060 = vunpack.c.h.b16 %v391
    %v1061 = vunpack.c.l.b16 %v392
    %v1062 = vunpack.c.h.b16 %v392
    %v1063 = vunpack.c.l.b16 %v393
    %v1064 = vunpack.c.h.b16 %v393
    %v1065 = vunpack.c.l.b16 %v394
    %v1066 = vunpack.c.h.b16 %v394
    %v1067 = vunpack.c.l.b16 %v395
    %v1068 = vunpack.c.h.b16 %v395
    %v1069 = vunpack.c.l.b16 %v396
    %v1070 = vunpack.c.h.b16 %v396
    %v1071 = vunpack.c.l.b16 %v397
    %v1072 = vunpack.c.h.b16 %v397
    %v1073 = vunpack.c.l.b16 %v398
    %v1074 = vunpack.c.h.b16 %v398
    %v1075 = vunpack.c.l.b16 %v399
    %v1076 = vunpack.c.h.b16 %v399
    %v1077 = vunpack.c.l.b16 %v400
    %v1078 = vunpack.c.h.b16 %v400
    %v1079 = vunpack.c.l.b16 %v401
    %v1080 = vunpack.c.h.b16 %v401
    %v1081 = vunpack.c.l.b16 %v402
    %v1082 = vunpack.c.h.b16 %v402
    %v1083 = vunpack.c.l.b16 %v403
    %v1084 = vunpack.c.h.b16 %v403
    %v1085 = vunpack.c.l.b16 %v404
    %v1086 = vunpack.c.h.b16 %v404
    %v1087 = vunpack.c.l.b16 %v405
    %v1088 = vunpack.c.h.b16 %v405
    %v1089 = vunpack.c.l.b16 %v406
    %v1090 = vunpack.c.h.b16 %v406
    %v1091 = vunpack.c.l.b16 %v407
    %v1092 = vunpack.c.h.b16 %v407
    %v1093 = vunpack.c.l.b16 %v408
    %v1094 = vunpack.c.h.b16 %v408
    %v1095 = vunpack.c.l.b16 %v409
    %v1096 = vunpack.c.h.b16 %v409
    %v1097 = vunpack.c.l.b16 %v410
    %v1098 = vunpack.c.h.b16 %v410
    %v1099 = vunpack.c.l.b16 %v411
    %v1100 = vunpack.c.h.b16 %v411
    %v1101 = vunpack.c.l.b16 %v412
    %v1102 = vunpack.c.h.b16 %v412
    %v1103 = vunpack.c.l.b16 %v413
    %v1104 = vunpack.c.h.b16 %v413
    %v1105 = vunpack.c.l.b16 %v414
    %v1106 = vunpack.c.h.b16 %v414
    %v1107 = vunpack.c.l.b16 %v415
    %v1108 = vunpack.c.h.b16 %v415
    %v1109 = vunpack.c.l.b16 %v416
    %v1110 = vunpack.c.h.b16 %v416
    %v1111 = vunpack.c.l.b16 %v417
    %v1112 = vunpack.c.h.b16 %v417
    %v1113 = vunpack.c.l.b16 %v418
    %v1114 = vunpack.c.h.b16 %v418
    %v1115 = vunpack.c.l.b16 %v419
    %v1116 = vunpack.c.h.b16 %v419
    %v1117 = vunpack.c.l.b16 %v420
    %v1118 = vunpack.c.h.b16 %v420
    %v1119 = vunpack.c.l.b16 %v421
    %v1120 = vunpack.c.h.b16 %v421
    %v1121 = vunpack.c.l.b16 %v422
    %v1122 = vunpack.c.h.b16 %v422
    %v1123 = vunpack.c.l.b16 %v423
    %v1124 = vunpack.c.h.b16 %v423
    %v1125 = vunpack.c.l.b16 %v424
    %v1126 = vunpack.c.h.b16 %v424
    %v1127 = vunpack.c.l.b16 %v425
    %v1128 = vunpack.c.h.b16 %v425
    %v1129 = vunpack.c.l.b16 %v426
    %v1130 = vunpack.c.h.b16 %v426
    %v1131 = vunpack.c.l.b16 %v427
    %v1132 = vunpack.c.h.b16 %v427
    %v1133 = vunpack.c.l.b16 %v428
    %v1134 = vunpack.c.h.b16 %v428
    %v1135 = vunpack.c.l.b16 %v429
    %v1136 = vunpack.c.h.b16 %v429
    %v1137 = vunpack.c.l.b16 %v430
    %v1138 = vunpack.c.h.b16 %v430
    %v1139 = vunpack.c.l.b16 %v431
    %v1140 = vunpack.c.h.b16 %v431
    %v1141 = vunpack.c.l.b16 %v432
    %v1142 = vunpack.c.h.b16 %v432
    %v1143 = vunpack.c.l.b16 %v433
    %v1144 = vunpack.c.h.b16 %v433
    %v1145 = vunpack.c.l.b16 %v434
    %v1146 = vunpack.c.h.b16 %v434
    %v1147 = vunpack.c.l.b16 %v435
    %v1148 = vunpack.c.h.b16 %v435
    %v1149 = vunpack.c.l.b16 %v436
    %v1150 = vunpack.c.h.b16 %v436
    %v1151 = vunpack.c.l.b16 %v437
    %v1152 = vunpack.c.h.b16 %v437
    %v1153 = vunpack.c.l.b16 %v438
    %v1154 = vunpack.c.h.b16 %v438
    %v1155 = vunpack.c.l.b16 %v439
    %v1156 = vunpack.c.h.b16 %v439
    %v1157 = vunpack.c.l.b16 %v440
    %v1158 = vunpack.c.h.b16 %v440
    %v1159 = vunpack.c.l.b16 %v441
    %v1160 = vunpack.c.h.b16 %v441
    %v1161 = vunpack.c.l.b16 %v442
    %v1162 = vunpack.c.h.b16 %v442
    %v1163 = vunpack.c.l.b16 %v443
    %v1164 = vunpack.c.h.b16 %v443
    %v1165 = vunpack.c.l.b16 %v444
    %v1166 = vunpack.c.h.b16 %v444
    %v1167 = vunpack.c.l.b16 %v445
    %v1168 = vunpack.c.h.b16 %v445
    %v1169 = vunpack.c.l.b16 %v446
    %v1170 = vunpack.c.h.b16 %v446
    %v1171 = vunpack.c.l.b16 %v447
    %v1172 = vunpack.c.h.b16 %v447
    %v1173 = vunpack.c.l.b16 %v448
    %v1174 = vunpack.c.h.b16 %v448
    %v1175 = vunpack.c.l.b16 %v449
    %v1176 = vunpack.c.h.b16 %v449
    %v1177 = vunpack.c.l.b16 %v450
    %v1178 = vunpack.c.h.b16 %v450
    %v1179 = vunpack.c.l.b16 %v451
    %v1180 = vunpack.c.h.b16 %v451
    %v1181 = vunpack.c.l.b16 %v452
    %v1182 = vunpack.c.h.b16 %v452
    %v1183 = vunpack.c.l.b16 %v453
    %v1184 = vunpack.c.h.b16 %v453
    %v1185 = vunpack.c.l.b16 %v454
    %v1186 = vunpack.c.h.b16 %v454
    %v1187 = vunpack.c.l.b16 %v455
    %v1188 = vunpack.c.h.b16 %v455
    %v1189 = vunpack.c.l.b16 %v456
    %v1190 = vunpack.c.h.b16 %v456
    %v1191 = vunpack.c.l.b16 %v457
    %v1192 = vunpack.c.h.b16 %v457
    %v1193 = vunpack.c.l.b16 %v458
    %v1194 = vunpack.c.h.b16 %v458
    %v1195 = vunpack.c.l.b16 %v459
    %v1196 = vunpack.c.h.b16 %v459
    %v1197 = vunpack.c.l.b16 %v460
    %v1198 = vunpack.c.h.b16 %v460
    %v1199 = vunpack.c.l.b16 %v461
    %v1200 = vunpack.c.h.b16 %v461
    %v1201 = vunpack.c.l.b16 %v462
    %v1202 = vunpack.c.h.b16 %v462
    %v1203 = vunpack.c.l.b16 %v463
    %v1204 = vunpack.c.h.b16 %v463
    %v1205 = vunpack.c.l.b16 %v464
    %v1206 = vunpack.c.h.b16 %v464
    %v1207 = vunpack.c.l.b16 %v465
    %v1208 = vunpack.c.h.b16 %v465
    %v1209 = vunpack.c.l.b16 %v466
    %v1210 = vunpack.c.h.b16 %v466
    %v1211 = vunpack.c.l.b16 %v467
    %v1212 = vunpack.c.h.b16 %v467
    %v1213 = vunpack.c.l.b16 %v468
    %v1214 = vunpack.c.h.b16 %v468
    %v1215 = vunpack.c.l.b16 %v469
    %v1216 = vunpack.c.h.b16 %v469
    %v1217 = vunpack.c.l.b16 %v470
    %v1218 = vunpack.c.h.b16 %v470
    %v1219 = vunpack.c.l.b16 %v471
    %v1220 = vunpack.c.h.b16 %v471
    %v1221 = vunpack.c.l.b16 %v472
    %v1222 = vunpack.c.h.b16 %v472
    %v1223 = vunpack.c.l.b16 %v473
    %v1224 = vunpack.c.h.b16 %v473
    %v1225 = vunpack.c.l.b16 %v474
    %v1226 = vunpack.c.h.b16 %v474
    %v1227 = vunpack.c.l.b16 %v475
    %v1228 = vunpack.c.h.b16 %v475
    %v1229 = vunpack.c.l.b16 %v476
    %v1230 = vunpack.c.h.b16 %v476
    %v1231 = vunpack.c.l.b16 %v477
    %v1232 = vunpack.c.h.b16 %v477
    %v1233 = vunpack.c.l.b16 %v478
    %v1234 = vunpack.c.h.b16 %v478
    %v1235 = vunpack.c.l.b16 %v479
    %v1236 = vunpack.c.h.b16 %v479
    %v1237 = vunpack.c.l.b16 %v480
    %v1238 = vunpack.c.h.b16 %v480
    %v1239 = vunpack.c.l.b16 %v481
    %v1240 = vunpack.c.h.b16 %v481
    %v1241 = vunpack.c.l.b16 %v482
    %v1242 = vunpack.c.h.b16 %v482
    %v1243 = vunpack.c.l.b16 %v483
    %v1244 = vunpack.c.h.b16 %v483
    %v1245 = vunpack.c.l.b16 %v484
    %v1246 = vunpack.c.h.b16 %v484
    %v1247 = vunpack.c.l.b16 %v485
    %v1248 = vunpack.c.h.b16 %v485
    %v1249 = vunpack.c.l.b16 %v486
    %v1250 = vunpack.c.h.b16 %v486
    %v1251 = vunpack.c.l.b16 %v487
    %v1252 = vunpack.c.h.b16 %v487
    %v1253 = vunpack.c.l.b16 %v488
    %v1254 = vunpack.c.h.b16 %v488
    %v1255 = vunpack.c.l.b16 %v489
    %v1256 = vunpack.c.h.b16 %v489
    %v1257 = vunpack.c.l.b16 %v490
    %v1258 = vunpack.c.h.b16 %v490
    %v1259 = vunpack.c.l.b16 %v491
    %v1260 = vunpack.c.h.b16 %v491
    %v1261 = vunpack.c.l.b16 %v492
    %v1262 = vunpack.c.h.b16 %v492
    %v1263 = vunpack.c.l.b16 %v493
    %v1264 = vunpack.c.h.b16 %v493
    %v1265 = vunpack.c.l.b16 %v494
    %v1266 = vunpack.c.h.b16 %v494
    %v1267 = vunpack.c.l.b16 %v495
    %v1268 = vunpack.c.h.b16 %v495
    %v1269 = vunpack.c.l.b16 %v496
    %v1270 = vunpack.c.h.b16 %v496
    %v1271 = vunpack.c.l.b16 %v497
    %v1272 = vunpack.c.h.b16 %v497
    %v1273 = vunpack.c.l.b16 %v498
    %v1274 = vunpack.c.h.b16 %v498
    %v1275 = vunpack.c.l.b16 %v499
    %v1276 = vunpack.c.h.b16 %v499
    %v1277 = vunpack.c.l.b16 %v500
    %v1278 = vunpack.c.h.b16 %v500
    %v1279 = vunpack.c.l.b16 %v501
    %v1280 = vunpack.c.h.b16 %v501
    %v1281 = vunpack.c.l.b16 %v502
    %v1282 = vunpack.c.h.b16 %v502
    %v1283 = vunpack.c.l.b16 %v503
    %v1284 = vunpack.c.h.b16 %v503
    %v1285 = vunpack.c.l.b16 %v504
    %v1286 = vunpack.c.h.b16 %v504
    %v1287 = vunpack.c.l.b16 %v505
    %v1288 = vunpack.c.h.b16 %v505
    %v1289 = vunpack.c.l.b16 %v506
    %v1290 = vunpack.c.h.b16 %v506
    %v1291 = vunpack.c.l.b16 %v507
    %v1292 = vunpack.c.h.b16 %v507
    %v1293 = vunpack.c.l.b16 %v508
    %v1294 = vunpack.c.h.b16 %v508
    %v1295 = vunpack.c.l.b16 %v509
    %v1296 = vunpack.c.h.b16 %v509
    %v1297 = vunpack.c.l.b16 %v510
    %v1298 = vunpack.c.h.b16 %v510
    %v1299 = vunpack.c.l.b16 %v511
    %v1300 = vunpack.c.h.b16 %v511
    %v1301 = vunpack.c.l.b16 %v512
    %v1302 = vunpack.c.h.b16 %v512
    %v1303 = vunpack.c.l.b16 %v513
    %v1304 = vunpack.c.h.b16 %v513
    %v1305 = vunpack.c.l.b16 %v514
    %v1306 = vunpack.c.h.b16 %v514
    %v1307 = vunpack.c.l.b16 %v515
    %v1308 = vunpack.c.h.b16 %v515
    %v1309 = vunpack.c.l.b16 %v516
    %v1310 = vunpack.c.h.b16 %v516
    %v1311 = vunpack.c.l.b16 %v517
    %v1312 = vunpack.c.h.b16 %v517
    %v1313 = vunpack.c.l.b16 %v518
    %v1314 = vunpack.c.h.b16 %v518
    %v1315 = vunpack.c.l.b16 %v519
    %v1316 = vunpack.c.h.b16 %v519
    %v1317 = vunpack.c.l.b16 %v520
    %v1318 = vunpack.c.h.b16 %v520
    %v1319 = vunpack.c.l.b16 %v521
    %v1320 = vunpack.c.h.b16 %v521
    %v1321 = vunpack.c.l.b16 %v522
    %v1322 = vunpack.c.h.b16 %v522
    %v1323 = vunpack.c.l.b16 %v523
    %v1324 = vunpack.c.h.b16 %v523
    %v1325 = vunpack.c.l.b16 %v524
    %v1326 = vunpack.c.h.b16 %v524
    %v1327 = vunpack.c.l.b16 %v525
    %v1328 = vunpack.c.h.b16 %v525
    %v1329 = vunpack.c.l.b16 %v526
    %v1330 = vunpack.c.h.b16 %v526
    %v1331 = vunpack.c.l.b16 %v527
    %v1332 = vunpack.c.h.b16 %v527
    %v1333 = vunpack.c.l.b16 %v528
    %v1334 = vunpack.c.h.b16 %v528
    %v1335 = vunpack.c.l.b16 %v529
    %v1336 = vunpack.c.h.b16 %v529
    %v1337 = vunpack.c.l.b16 %v530
    %v1338 = vunpack.c.h.b16 %v530
    %v1339 = vunpack.c.l.b16 %v531
    %v1340 = vunpack.c.h.b16 %v531
    %v1341 = vunpack.c.l.b16 %v532
    %v1342 = vunpack.c.h.b16 %v532
    %v1343 = vpack.c.b16 %v839, %v831
    %v1344 = vpack.c.b16 %v840, %v832
    %v1345 = vpack.c.b16 %v841, %v833
    %v1346 = vpack.c.b16 %v842, %v834
    %v1347 = vpack.c.b16 %v843, %v835
    %v1348 = vpack.c.b16 %v844, %v836
    %v1349 = vpack.c.b16 %v845, %v837
    %v1350 = vpack.c.b16 %v846, %v838
    %v1351 = vpack.c.b16 %v855, %v847
    %v1352 = vpack.c.b16 %v856, %v848
    %v1353 = vpack.c.b16 %v857, %v849
    %v1354 = vpack.c.b16 %v858, %v850
    %v1355 = vpack.c.b16 %v859, %v851
    %v1356 = vpack.c.b16 %v860, %v852
    %v1357 = vpack.c.b16 %v861, %v853
    %v1358 = vpack.c.b16 %v862, %v854
    %v1359 = vpack.c.b16 %v871, %v863
    %v1360 = vpack.c.b16 %v872, %v864
    %v1361 = vpack.c.b16 %v873, %v865
    %v1362 = vpack.c.b16 %v874, %v866
    %v1363 = vpack.c.b16 %v875, %v867
    %v1364 = vpack.c.b16 %v876, %v868
    %v1365 = vpack.c.b16 %v877, %v869
    %v1366 = vpack.c.b16 %v878, %v870
    %v1367 = vpack.c.b16 %v887, %v879
    %v1368 = vpack.c.b16 %v888, %v880
    %v1369 = vpack.c.b16 %v889, %v881
    %v1370 = vpack.c.b16 %v890, %v882
    %v1371 = vpack.c.b16 %v891, %v883
    %v1372 = vpack.c.b16 %v892, %v884
    %v1373 = vpack.c.b16 %v893, %v885
    %v1374 = vpack.c.b16 %v894, %v886
    %v1375 = vpack.c.b16 %v903, %v895
    %v1376 = vpack.c.b16 %v904, %v896
    %v1377 = vpack.c.b16 %v905, %v897
    %v1378 = vpack.c.b16 %v906, %v898
    %v1379 = vpack.c.b16 %v907, %v899
    %v1380 = vpack.c.b16 %v908, %v900
    %v1381 = vpack.c.b16 %v909, %v901
    %v1382 = vpack.c.b16 %v910, %v902
    %v1383 = vpack.c.b16 %v919, %v911
    %v1384 = vpack.c.b16 %v920, %v912
    %v1385 = vpack.c.b16 %v921, %v913
    %v1386 = vpack.c.b16 %v922, %v914
    %v1387 = vpack.c.b16 %v923, %v915
    %v1388 = vpack.c.b16 %v924, %v916
    %v1389 = vpack.c.b16 %v925, %v917
    %v1390 = vpack.c.b16 %v926, %v918
    %v1391 = vpack.c.b16 %v935, %v927
    %v1392 = vpack.c.b16 %v936, %v928
    %v1393 = vpack.c.b16 %v937, %v929
    %v1394 = vpack.c.b16 %v938, %v930
    %v1395 = vpack.c.b16 %v939, %v931
    %v1396 = vpack.c.b16 %v940, %v932
    %v1397 = vpack.c.b16 %v941, %v933
    %v1398 = vpack.c.b16 %v942, %v934
    %v1399 = vpack.c.b16 %v951, %v943
    %v1400 = vpack.c.b16 %v952, %v944
    %v1401 = vpack.c.b16 %v953, %v945
    %v1402 = vpack.c.b16 %v954, %v946
    %v1403 = vpack.c.b16 %v955, %v947
    %v1404 = vpack.c.b16 %v956, %v948
    %v1405 = vpack.c.b16 %v957, %v949
    %v1406 = vpack.c.b16 %v958, %v950
    %v1407 = vpack.c.b16 %v967, %v959
    %v1408 = vpack.c.b16 %v968, %v960
    %v1409 = vpack.c.b16 %v969, %v961
    %v1410 = vpack.c.b16 %v970, %v962
    %v1411 = vpack.c.b16 %v971, %v963
    %v1412 = vpack.c.b16 %v972, %v964
    %v1413 = vpack.c.b16 %v973, %v965
    %v1414 = vpack.c.b16 %v974, %v966
    %v1415 = vpack.c.b16 %v983, %v975
    %v1416 = vpack.c.b16 %v984, %v976
    %v1417 = vpack.c.b16 %v985, %v977
    %v1418 = vpack.c.b16 %v986, %v978
    %v1419 = vpack.c.b16 %v987, %v979
    %v1420 = vpack.c.b16 %v988, %v980
    %v1421 = vpack.c.b16 %v989, %v981
    %v1422 = vpack.c.b16 %v990, %v982
    %v1423 = vpack.c.b16 %v999, %v991
    %v1424 = vpack.c.b16 %v1000, %v992
    %v1425 = vpack.c.b16 %v1001, %v993
    %v1426 = vpack.c.b16 %v1002, %v994
    %v1427 = vpack.c.b16 %v1003, %v995
    %v1428 = vpack.c.b16 %v1004, %v996
    %v1429 = vpack.c.b16 %v1005, %v997
    %v1430 = vpack.c.b16 %v1006, %v998
    %v1431 = vpack.c.b16 %v1015, %v1007
    %v1432 = vpack.c.b16 %v1016, %v1008
    %v1433 = vpack.c.b16 %v1017, %v1009
    %v1434 = vpack.c.b16 %v1018, %v1010
    %v1435 = vpack.c.b16 %v1019, %v1011
    %v1436 = vpack.c.b16 %v1020, %v1012
    %v1437 = vpack.c.b16 %v1021, %v1013
    %v1438 = vpack.c.b16 %v1022, %v1014
    %v1439 = vpack.c.b16 %v1031, %v1023
    %v1440 = vpack.c.b16 %v1032, %v1024
    %v1441 = vpack.c.b16 %v1033, %v1025
    %v1442 = vpack.c.b16 %v1034, %v1026
    %v1443 = vpack.c.b16 %v1035, %v1027
    %v1444 = vpack.c.b16 %v1036, %v1028
    %v1445 = vpack.c.b16 %v1037, %v1029
    %v1446 = vpack.c.b16 %v1038, %v1030
    %v1447 = vpack.c.b16 %v1047, %v1039
    %v1448 = vpack.c.b16 %v1048, %v1040
    %v1449 = vpack.c.b16 %v1049, %v1041
    %v1450 = vpack.c.b16 %v1050, %v1042
    %v1451 = vpack.c.b16 %v1051, %v1043
    %v1452 = vpack.c.b16 %v1052, %v1044
    %v1453 = vpack.c.b16 %v1053, %v1045
    %v1454 = vpack.c.b16 %v1054, %v1046
    %v1455 = vpack.c.b16 %v1063, %v1055
    %v1456 = vpack.c.b16 %v1064, %v1056
    %v1457 = vpack.c.b16 %v1065, %v1057
    %v1458 = vpack.c.b16 %v1066, %v1058
    %v1459 = vpack.c.b16 %v1067, %v1059
    %v1460 = vpack.c.b16 %v1068, %v1060
    %v1461 = vpack.c.b16 %v1069, %v1061
    %v1462 = vpack.c.b16 %v1070, %v1062
    %v1463 = vpack.c.b16 %v1079, %v1071
    %v1464 = vpack.c.b16 %v1080, %v1072
    %v1465 = vpack.c.b16 %v1081, %v1073
    %v1466 = vpack.c.b16 %v1082, %v1074
    %v1467 = vpack.c.b16 %v1083, %v1075
    %v1468 = vpack.c.b16 %v1084, %v1076
    %v1469 = vpack.c.b16 %v1085, %v1077
    %v1470 = vpack.c.b16 %v1086, %v1078
    %v1471 = vpack.c.b16 %v1095, %v1087
    %v1472 = vpack.c.b16 %v1096, %v1088
    %v1473 = vpack.c.b16 %v1097, %v1089
    %v1474 = vpack.c.b16 %v1098, %v1090
    %v1475 = vpack.c.b16 %v1099, %v1091
    %v1476 = vpack.c.b16 %v1100, %v1092
    %v1477 = vpack.c.b16 %v1101, %v1093
    %v1478 = vpack.c.b16 %v1102, %v1094
    %v1479 = vpack.c.b16 %v1111, %v1103
    %v1480 = vpack.c.b16 %v1112, %v1104
    %v1481 = vpack.c.b16 %v1113, %v1105
    %v1482 = vpack.c.b16 %v1114, %v1106
    %v1483 = vpack.c.b16 %v1115, %v1107
    %v1484 = vpack.c.b16 %v1116, %v1108
    %v1485 = vpack.c.b16 %v1117, %v1109
    %v1486 = vpack.c.b16 %v1118, %v1110
    %v1487 = vpack.c.b16 %v1127, %v1119
    %v1488 = vpack.c.b16 %v1128, %v1120
    %v1489 = vpack.c.b16 %v1129, %v1121
    %v1490 = vpack.c.b16 %v1130, %v1122
    %v1491 = vpack.c.b16 %v1131, %v1123
    %v1492 = vpack.c.b16 %v1132, %v1124
    %v1493 = vpack.c.b16 %v1133, %v1125
    %v1494 = vpack.c.b16 %v1134, %v1126
    %v1495 = vpack.c.b16 %v1143, %v1135
    %v1496 = vpack.c.b16 %v1144, %v1136
    %v1497 = vpack.c.b16 %v1145, %v1137
    %v1498 = vpack.c.b16 %v1146, %v1138
    %v1499 = vpack.c.b16 %v1147, %v1139
    %v1500 = vpack.c.b16 %v1148, %v1140
    %v1501 = vpack.c.b16 %v1149, %v1141
    %v1502 = vpack.c.b16 %v1150, %v1142
    %v1503 = vpack.c.b16 %v1159, %v1151
    %v1504 = vpack.c.b16 %v1160, %v1152
    %v1505 = vpack.c.b16 %v1161, %v1153
    %v1506 = vpack.c.b16 %v1162, %v1154
    %v1507 = vpack.c.b16 %v1163, %v1155
    %v1508 = vpack.c.b16 %v1164, %v1156
    %v1509 = vpack.c.b16 %v1165, %v1157
    %v1510 = vpack.c.b16 %v1166, %v1158
    %v1511 = vpack.c.b16 %v1175, %v1167
    %v1512 = vpack.c.b16 %v1176, %v1168
    %v1513 = vpack.c.b16 %v1177, %v1169
    %v1514 = vpack.c.b16 %v1178, %v1170
    %v1515 = vpack.c.b16 %v1179, %v1171
    %v1516 = vpack.c.b16 %v1180, %v1172
    %v1517 = vpack.c.b16 %v1181, %v1173
    %v1518 = vpack.c.b16 %v1182, %v1174
    %v1519 = vpack.c.b16 %v1191, %v1183
    %v1520 = vpack.c.b16 %v1192, %v1184
    %v1521 = vpack.c.b16 %v1193, %v1185
    %v1522 = vpack.c.b16 %v1194, %v1186
    %v1523 = vpack.c.b16 %v1195, %v1187
    %v1524 = vpack.c.b16 %v1196, %v1188
    %v1525 = vpack.c.b16 %v1197, %v1189
    %v1526 = vpack.c.b16 %v1198, %v1190
    %v1527 = vpack.c.b16 %v1207, %v1199
    %v1528 = vpack.c.b16 %v1208, %v1200
    %v1529 = vpack.c.b16 %v1209, %v1201
    %v1530 = vpack.c.b16 %v1210, %v1202
    %v1531 = vpack.c.b16 %v1211, %v1203
    %v1532 = vpack.c.b16 %v1212, %v1204
    %v1533 = vpack.c.b16 %v1213, %v1205
    %v1534 = vpack.c.b16 %v1214, %v1206
    %v1535 = vpack.c.b16 %v1223, %v1215
    %v1536 = vpack.c.b16 %v1224, %v1216
    %v1537 = vpack.c.b16 %v1225, %v1217
    %v1538 = vpack.c.b16 %v1226, %v1218
    %v1539 = vpack.c.b16 %v1227, %v1219
    %v1540 = vpack.c.b16 %v1228, %v1220
    %v1541 = vpack.c.b16 %v1229, %v1221
    %v1542 = vpack.c.b16 %v1230, %v1222
    %v1543 = vpack.c.b16 %v1239, %v1231
    %v1544 = vpack.c.b16 %v1240, %v1232
    %v1545 = vpack.c.b16 %v1241, %v1233
    %v1546 = vpack.c.b16 %v1242, %v1234
    %v1547 = vpack.c.b16 %v1243, %v1235
    %v1548 = vpack.c.b16 %v1244, %v1236
    %v1549 = vpack.c.b16 %v1245, %v1237
    %v1550 = vpack.c.b16 %v1246, %v1238
    %v1551 = vpack.c.b16 %v1255, %v1247
    %v1552 = vpack.c.b16 %v1256, %v1248
    %v1553 = vpack.c.b16 %v1257, %v1249
    %v1554 = vpack.c.b16 %v1258, %v1250
    %v1555 = vpack.c.b16 %v1259, %v1251
    %v1556 = vpack.c.b16 %v1260, %v1252
    %v1557 = vpack.c.b16 %v1261, %v1253
    %v1558 = vpack.c.b16 %v1262, %v1254
    %v1559 = vpack.c.b16 %v1271, %v1263
    %v1560 = vpack.c.b16 %v1272, %v1264
    %v1561 = vpack.c.b16 %v1273, %v1265
    %v1562 = vpack.c.b16 %v1274, %v1266
    %v1563 = vpack.c.b16 %v1275, %v1267
    %v1564 = vpack.c.b16 %v1276, %v1268
    %v1565 = vpack.c.b16 %v1277, %v1269
    %v1566 = vpack.c.b16 %v1278, %v1270
    %v1567 = vpack.c.b16 %v1287, %v1279
    %v1568 = vpack.c.b16 %v1288, %v1280
    %v1569 = vpack.c.b16 %v1289, %v1281
    %v1570 = vpack.c.b16 %v1290, %v1282
    %v1571 = vpack.c.b16 %v1291, %v1283
    %v1572 = vpack.c.b16 %v1292, %v1284
    %v1573 = vpack.c.b16 %v1293, %v1285
    %v1574 = vpack.c.b16 %v1294, %v1286
    %v1575 = vpack.c.b16 %v1303, %v1295
    %v1576 = vpack.c.b16 %v1304, %v1296
    %v1577 = vpack.c.b16 %v1305, %v1297
    %v1578 = vpack.c.b16 %v1306, %v1298
    %v1579 = vpack.c.b16 %v1307, %v1299
    %v1580 = vpack.c.b16 %v1308, %v1300
    %v1581 = vpack.c.b16 %v1309, %v1301
    %v1582 = vpack.c.b16 %v1310, %v1302
    %v1583 = vpack.c.b16 %v1319, %v1311
    %v1584 = vpack.c.b16 %v1320, %v1312
    %v1585 = vpack.c.b16 %v1321, %v1313
    %v1586 = vpack.c.b16 %v1322, %v1314
    %v1587 = vpack.c.b16 %v1323, %v1315
    %v1588 = vpack.c.b16 %v1324, %v1316
    %v1589 = vpack.c.b16 %v1325, %v1317
    %v1590 = vpack.c.b16 %v1326, %v1318
    %v1591 = vpack.c.b16 %v1335, %v1327
    %v1592 = vpack.c.b16 %v1336, %v1328
    %v1593 = vpack.c.b16 %v1337, %v1329
    %v1594 = vpack.c.b16 %v1338, %v1330
    %v1595 = vpack.c.b16 %v1339, %v1331
    %v1596 = vpack.c.b16 %v1340, %v1332
    %v1597 = vpack.c.b16 %v1341, %v1333
    %v1598 = vpack.c.b16 %v1342, %v1334
    %1855 = vmatprep.subr.bf16.mxu0 %v1400
    %1856 = vmatpush1.bf16.msra.mxu0 %v1399
    %1857 = vmatprep.subr.bf16.mxu0 %v1392
    %1858 = vmatpush1.bf16.msra.mxu0 %v1391
    %1859 = vmatprep.subr.bf16.mxu0 %v1384
    %1860 = vmatpush1.bf16.msra.mxu0 %v1383
    %1861 = vmatprep.subr.bf16.mxu0 %v1376
    %1862 = vmatpush1.bf16.msra.mxu0 %v1375
    %1863 = vmatprep.subr.bf16.mxu0 %v1368
    %1864 = vmatpush1.bf16.msra.mxu0 %v1367
    %1865 = vmatprep.subr.bf16.mxu0 %v1360
    %1866 = vmatpush1.bf16.msra.mxu0 %v1359
    %1867 = vmatprep.subr.bf16.mxu0 %v1352
    %1868 = vmatpush1.bf16.msra.mxu0 %v1351
    %1869 = vmatprep.subr.bf16.mxu0 %v1344
    %1870 = vmatpush1.bf16.msra.mxu0 %v1343
    %1871 = vmatprep.subr.bf16.mxu0 %v1464
    %1872 = vmatpush2.bf16.msra.mxu0 %v1463
    %1873 = vmatprep.subr.bf16.mxu0 %v1456
    %1874 = vmatpush2.bf16.msra.mxu0 %v1455
    %1875 = vmatprep.subr.bf16.mxu0 %v1448
    %1876 = vmatpush2.bf16.msra.mxu0 %v1447
    %1877 = vmatprep.subr.bf16.mxu0 %v1440
    %1878 = vmatpush2.bf16.msra.mxu0 %v1439
    %1879 = vmatprep.subr.bf16.mxu0 %v1432
    %1880 = vmatpush2.bf16.msra.mxu0 %v1431
    %1881 = vmatprep.subr.bf16.mxu0 %v1424
    %1882 = vmatpush2.bf16.msra.mxu0 %v1423
    %1883 = vmatprep.subr.bf16.mxu0 %v1416
    %1884 = vmatpush2.bf16.msra.mxu0 %v1415
    %1885 = vmatprep.subr.bf16.mxu0 %v1408
    %1886 = vmatpush2.bf16.msra.mxu0 %v1407
    %1887 = vmatprep.mubr.bf16.mxu0 %v274
    %1888 = vmatmul.mubr.bf16.gmra.mxu0 %v273
    %v1889 = vpop.f32.mrf.mxu0
    %v1890 = vadd.f32 %v538, %v1889
    %v1891 = vpop.f32.mrf.mxu0
    %v1892 = vadd.f32 %v542, %v1891
    %v1893 = vpop.f32.mrf.mxu0
    %v1894 = vpop.f32.mrf.mxu0
    %1895 = vdwg.mxu0
    %1896 = vmatprep.subr.bf16.mxu0 %v1528
    %1897 = vmatpush1.bf16.msra.mxu0 %v1527
    %1898 = vmatprep.subr.bf16.mxu0 %v1520
    %1899 = vmatpush1.bf16.msra.mxu0 %v1519
    %1900 = vmatprep.subr.bf16.mxu0 %v1512
    %1901 = vmatpush1.bf16.msra.mxu0 %v1511
    %1902 = vmatprep.subr.bf16.mxu0 %v1504
    %1903 = vmatpush1.bf16.msra.mxu0 %v1503
    %1904 = vmatprep.subr.bf16.mxu0 %v1496
    %1905 = vmatpush1.bf16.msra.mxu0 %v1495
    %1906 = vmatprep.subr.bf16.mxu0 %v1488
    %1907 = vmatpush1.bf16.msra.mxu0 %v1487
    %1908 = vmatprep.subr.bf16.mxu0 %v1480
    %1909 = vmatpush1.bf16.msra.mxu0 %v1479
    %1910 = vmatprep.subr.bf16.mxu0 %v1472
    %1911 = vmatpush1.bf16.msra.mxu0 %v1471
    %1912 = vmatprep.subr.bf16.mxu0 %v1592
    %1913 = vmatpush2.bf16.msra.mxu0 %v1591
    %1914 = vmatprep.subr.bf16.mxu0 %v1584
    %1915 = vmatpush2.bf16.msra.mxu0 %v1583
    %1916 = vmatprep.subr.bf16.mxu0 %v1576
    %1917 = vmatpush2.bf16.msra.mxu0 %v1575
    %1918 = vmatprep.subr.bf16.mxu0 %v1568
    %1919 = vmatpush2.bf16.msra.mxu0 %v1567
    %1920 = vmatprep.subr.bf16.mxu0 %v1560
    %1921 = vmatpush2.bf16.msra.mxu0 %v1559
    %1922 = vmatprep.subr.bf16.mxu0 %v1552
    %1923 = vmatpush2.bf16.msra.mxu0 %v1551
    %1924 = vmatprep.subr.bf16.mxu0 %v1544
    %1925 = vmatpush2.bf16.msra.mxu0 %v1543
    %1926 = vmatprep.subr.bf16.mxu0 %v1536
    %1927 = vmatpush2.bf16.msra.mxu0 %v1535
    %1928 = vmatprep.mubr.bf16.mxu0 %v276
    %1929 = vmatmul.mubr.bf16.gmra.mxu0 %v275
    %v1930 = vpop.f32.mrf.mxu0
    %v1931 = vadd.f32 %v1890, %v1930
    %v1932 = vpop.f32.mrf.mxu0
    %v1933 = vadd.f32 %v1892, %v1932
    %v1934 = vpop.f32.mrf.mxu0
    %v1935 = vpop.f32.mrf.mxu0
    %1936 = vdwg.mxu0
    %1937 = vmatprep.subr.bf16.mxu0 %v1402
    %1938 = vmatpush1.bf16.msra.mxu0 %v1401
    %1939 = vmatprep.subr.bf16.mxu0 %v1394
    %1940 = vmatpush1.bf16.msra.mxu0 %v1393
    %1941 = vmatprep.subr.bf16.mxu0 %v1386
    %1942 = vmatpush1.bf16.msra.mxu0 %v1385
    %1943 = vmatprep.subr.bf16.mxu0 %v1378
    %1944 = vmatpush1.bf16.msra.mxu0 %v1377
    %1945 = vmatprep.subr.bf16.mxu0 %v1370
    %1946 = vmatpush1.bf16.msra.mxu0 %v1369
    %1947 = vmatprep.subr.bf16.mxu0 %v1362
    %1948 = vmatpush1.bf16.msra.mxu0 %v1361
    %1949 = vmatprep.subr.bf16.mxu0 %v1354
    %1950 = vmatpush1.bf16.msra.mxu0 %v1353
    %1951 = vmatprep.subr.bf16.mxu0 %v1346
    %1952 = vmatpush1.bf16.msra.mxu0 %v1345
    %1953 = vmatprep.subr.bf16.mxu0 %v1466
    %1954 = vmatpush2.bf16.msra.mxu0 %v1465
    %1955 = vmatprep.subr.bf16.mxu0 %v1458
    %1956 = vmatpush2.bf16.msra.mxu0 %v1457
    %1957 = vmatprep.subr.bf16.mxu0 %v1450
    %1958 = vmatpush2.bf16.msra.mxu0 %v1449
    %1959 = vmatprep.subr.bf16.mxu0 %v1442
    %1960 = vmatpush2.bf16.msra.mxu0 %v1441
    %1961 = vmatprep.subr.bf16.mxu0 %v1434
    %1962 = vmatpush2.bf16.msra.mxu0 %v1433
    %1963 = vmatprep.subr.bf16.mxu0 %v1426
    %1964 = vmatpush2.bf16.msra.mxu0 %v1425
    %1965 = vmatprep.subr.bf16.mxu0 %v1418
    %1966 = vmatpush2.bf16.msra.mxu0 %v1417
    %1967 = vmatprep.subr.bf16.mxu0 %v1410
    %1968 = vmatpush2.bf16.msra.mxu0 %v1409
    %1969 = vmatprep.mubr.bf16.mxu0 %v274
    %1970 = vmatmul.mubr.bf16.gmra.mxu0 %v273
    %v1971 = vpop.f32.mrf.mxu0
    %v1972 = vadd.f32 %v546, %v1971
    %v1973 = vpop.f32.mrf.mxu0
    %v1974 = vadd.f32 %v550, %v1973
    %v1975 = vpop.f32.mrf.mxu0
    %v1976 = vpop.f32.mrf.mxu0
    %1977 = vdwg.mxu0
    %1978 = vmatprep.subr.bf16.mxu0 %v1530
    %1979 = vmatpush1.bf16.msra.mxu0 %v1529
    %1980 = vmatprep.subr.bf16.mxu0 %v1522
    %1981 = vmatpush1.bf16.msra.mxu0 %v1521
    %1982 = vmatprep.subr.bf16.mxu0 %v1514
    %1983 = vmatpush1.bf16.msra.mxu0 %v1513
    %1984 = vmatprep.subr.bf16.mxu0 %v1506
    %1985 = vmatpush1.bf16.msra.mxu0 %v1505
    %1986 = vmatprep.subr.bf16.mxu0 %v1498
    %1987 = vmatpush1.bf16.msra.mxu0 %v1497
    %1988 = vmatprep.subr.bf16.mxu0 %v1490
    %1989 = vmatpush1.bf16.msra.mxu0 %v1489
    %1990 = vmatprep.subr.bf16.mxu0 %v1482
    %1991 = vmatpush1.bf16.msra.mxu0 %v1481
    %1992 = vmatprep.subr.bf16.mxu0 %v1474
    %1993 = vmatpush1.bf16.msra.mxu0 %v1473
    %1994 = vmatprep.subr.bf16.mxu0 %v1594
    %1995 = vmatpush2.bf16.msra.mxu0 %v1593
    %1996 = vmatprep.subr.bf16.mxu0 %v1586
    %1997 = vmatpush2.bf16.msra.mxu0 %v1585
    %1998 = vmatprep.subr.bf16.mxu0 %v1578
    %1999 = vmatpush2.bf16.msra.mxu0 %v1577
    %2000 = vmatprep.subr.bf16.mxu0 %v1570
    %2001 = vmatpush2.bf16.msra.mxu0 %v1569
    %2002 = vmatprep.subr.bf16.mxu0 %v1562
    %2003 = vmatpush2.bf16.msra.mxu0 %v1561
    %2004 = vmatprep.subr.bf16.mxu0 %v1554
    %2005 = vmatpush2.bf16.msra.mxu0 %v1553
    %2006 = vmatprep.subr.bf16.mxu0 %v1546
    %2007 = vmatpush2.bf16.msra.mxu0 %v1545
    %2008 = vmatprep.subr.bf16.mxu0 %v1538
    %2009 = vmatpush2.bf16.msra.mxu0 %v1537
    %2010 = vmatprep.mubr.bf16.mxu0 %v276
    %2011 = vmatmul.mubr.bf16.gmra.mxu0 %v275
    %v2012 = vpop.f32.mrf.mxu0
    %v2013 = vadd.f32 %v1972, %v2012
    %v2014 = vpop.f32.mrf.mxu0
    %v2015 = vadd.f32 %v1974, %v2014
    %v2016 = vpop.f32.mrf.mxu0
    %v2017 = vpop.f32.mrf.mxu0
    %2018 = vdwg.mxu0
    %2019 = vmatprep.subr.bf16.mxu0 %v1404
    %2020 = vmatpush1.bf16.msra.mxu0 %v1403
    %2021 = vmatprep.subr.bf16.mxu0 %v1396
    %2022 = vmatpush1.bf16.msra.mxu0 %v1395
    %2023 = vmatprep.subr.bf16.mxu0 %v1388
    %2024 = vmatpush1.bf16.msra.mxu0 %v1387
    %2025 = vmatprep.subr.bf16.mxu0 %v1380
    %2026 = vmatpush1.bf16.msra.mxu0 %v1379
    %2027 = vmatprep.subr.bf16.mxu0 %v1372
    %2028 = vmatpush1.bf16.msra.mxu0 %v1371
    %2029 = vmatprep.subr.bf16.mxu0 %v1364
    %2030 = vmatpush1.bf16.msra.mxu0 %v1363
    %2031 = vmatprep.subr.bf16.mxu0 %v1356
    %2032 = vmatpush1.bf16.msra.mxu0 %v1355
    %2033 = vmatprep.subr.bf16.mxu0 %v1348
    %2034 = vmatpush1.bf16.msra.mxu0 %v1347
    %2035 = vmatprep.subr.bf16.mxu0 %v1468
    %2036 = vmatpush2.bf16.msra.mxu0 %v1467
    %2037 = vmatprep.subr.bf16.mxu0 %v1460
    %2038 = vmatpush2.bf16.msra.mxu0 %v1459
    %2039 = vmatprep.subr.bf16.mxu0 %v1452
    %2040 = vmatpush2.bf16.msra.mxu0 %v1451
    %2041 = vmatprep.subr.bf16.mxu0 %v1444
    %2042 = vmatpush2.bf16.msra.mxu0 %v1443
    %2043 = vmatprep.subr.bf16.mxu0 %v1436
    %2044 = vmatpush2.bf16.msra.mxu0 %v1435
    %2045 = vmatprep.subr.bf16.mxu0 %v1428
    %2046 = vmatpush2.bf16.msra.mxu0 %v1427
    %2047 = vmatprep.subr.bf16.mxu0 %v1420
    %2048 = vmatpush2.bf16.msra.mxu0 %v1419
    %2049 = vmatprep.subr.bf16.mxu0 %v1412
    %2050 = vmatpush2.bf16.msra.mxu0 %v1411
    %2051 = vmatprep.mubr.bf16.mxu0 %v274
    %2052 = vmatmul.mubr.bf16.gmra.mxu0 %v273
    %v2053 = vpop.f32.mrf.mxu0
    %v2054 = vadd.f32 %v554, %v2053
    %v2055 = vpop.f32.mrf.mxu0
    %v2056 = vadd.f32 %v558, %v2055
    %v2057 = vpop.f32.mrf.mxu0
    %v2058 = vpop.f32.mrf.mxu0
    %2059 = vdwg.mxu0
    %2060 = vmatprep.subr.bf16.mxu0 %v1532
    %2061 = vmatpush1.bf16.msra.mxu0 %v1531
    %2062 = vmatprep.subr.bf16.mxu0 %v1524
    %2063 = vmatpush1.bf16.msra.mxu0 %v1523
    %2064 = vmatprep.subr.bf16.mxu0 %v1516
    %2065 = vmatpush1.bf16.msra.mxu0 %v1515
    %2066 = vmatprep.subr.bf16.mxu0 %v1508
    %2067 = vmatpush1.bf16.msra.mxu0 %v1507
    %2068 = vmatprep.subr.bf16.mxu0 %v1500
    %2069 = vmatpush1.bf16.msra.mxu0 %v1499
    %2070 = vmatprep.subr.bf16.mxu0 %v1492
    %2071 = vmatpush1.bf16.msra.mxu0 %v1491
    %2072 = vmatprep.subr.bf16.mxu0 %v1484
    %2073 = vmatpush1.bf16.msra.mxu0 %v1483
    %2074 = vmatprep.subr.bf16.mxu0 %v1476
    %2075 = vmatpush1.bf16.msra.mxu0 %v1475
    %2076 = vmatprep.subr.bf16.mxu0 %v1596
    %2077 = vmatpush2.bf16.msra.mxu0 %v1595
    %2078 = vmatprep.subr.bf16.mxu0 %v1588
    %2079 = vmatpush2.bf16.msra.mxu0 %v1587
    %2080 = vmatprep.subr.bf16.mxu0 %v1580
    %2081 = vmatpush2.bf16.msra.mxu0 %v1579
    %2082 = vmatprep.subr.bf16.mxu0 %v1572
    %2083 = vmatpush2.bf16.msra.mxu0 %v1571
    %2084 = vmatprep.subr.bf16.mxu0 %v1564
    %2085 = vmatpush2.bf16.msra.mxu0 %v1563
    %2086 = vmatprep.subr.bf16.mxu0 %v1556
    %2087 = vmatpush2.bf16.msra.mxu0 %v1555
    %2088 = vmatprep.subr.bf16.mxu0 %v1548
    %2089 = vmatpush2.bf16.msra.mxu0 %v1547
    %2090 = vmatprep.subr.bf16.mxu0 %v1540
    %2091 = vmatpush2.bf16.msra.mxu0 %v1539
    %2092 = vmatprep.mubr.bf16.mxu0 %v276
    %2093 = vmatmul.mubr.bf16.gmra.mxu0 %v275
    %v2094 = vpop.f32.mrf.mxu0
    %v2095 = vadd.f32 %v2054, %v2094
    %v2096 = vpop.f32.mrf.mxu0
    %v2097 = vadd.f32 %v2056, %v2096
    %v2098 = vpop.f32.mrf.mxu0
    %v2099 = vpop.f32.mrf.mxu0
    %2100 = vdwg.mxu0
    %2101 = vmatprep.subr.bf16.mxu0 %v1406
    %2102 = vmatpush1.bf16.msra.mxu0 %v1405
    %2103 = vmatprep.subr.bf16.mxu0 %v1398
    %2104 = vmatpush1.bf16.msra.mxu0 %v1397
    %2105 = vmatprep.subr.bf16.mxu0 %v1390
    %2106 = vmatpush1.bf16.msra.mxu0 %v1389
    %2107 = vmatprep.subr.bf16.mxu0 %v1382
    %2108 = vmatpush1.bf16.msra.mxu0 %v1381
    %2109 = vmatprep.subr.bf16.mxu0 %v1374
    %2110 = vmatpush1.bf16.msra.mxu0 %v1373
    %2111 = vmatprep.subr.bf16.mxu0 %v1366
    %2112 = vmatpush1.bf16.msra.mxu0 %v1365
    %2113 = vmatprep.subr.bf16.mxu0 %v1358
    %2114 = vmatpush1.bf16.msra.mxu0 %v1357
    %2115 = vmatprep.subr.bf16.mxu0 %v1350
    %2116 = vmatpush1.bf16.msra.mxu0 %v1349
    %2117 = vmatprep.subr.bf16.mxu0 %v1470
    %2118 = vmatpush2.bf16.msra.mxu0 %v1469
    %2119 = vmatprep.subr.bf16.mxu0 %v1462
    %2120 = vmatpush2.bf16.msra.mxu0 %v1461
    %2121 = vmatprep.subr.bf16.mxu0 %v1454
    %2122 = vmatpush2.bf16.msra.mxu0 %v1453
    %2123 = vmatprep.subr.bf16.mxu0 %v1446
    %2124 = vmatpush2.bf16.msra.mxu0 %v1445
    %2125 = vmatprep.subr.bf16.mxu0 %v1438
    %2126 = vmatpush2.bf16.msra.mxu0 %v1437
    %2127 = vmatprep.subr.bf16.mxu0 %v1430
    %2128 = vmatpush2.bf16.msra.mxu0 %v1429
    %2129 = vmatprep.subr.bf16.mxu0 %v1422
    %2130 = vmatpush2.bf16.msra.mxu0 %v1421
    %2131 = vmatprep.subr.bf16.mxu0 %v1414
    %2132 = vmatpush2.bf16.msra.mxu0 %v1413
    %2133 = vmatprep.mubr.bf16.mxu0 %v274
    %2134 = vmatmul.mubr.bf16.gmra.mxu0 %v273
    %v2135 = vpop.f32.mrf.mxu0
    %v2136 = vadd.f32 %v562, %v2135
    %v2137 = vpop.f32.mrf.mxu0
    %v2138 = vadd.f32 %v566, %v2137
    %v2139 = vpop.f32.mrf.mxu0
    %v2140 = vpop.f32.mrf.mxu0
    %2141 = vdwg.mxu0
    %2142 = vmatprep.subr.bf16.mxu0 %v1534
    %2143 = vmatpush1.bf16.msra.mxu0 %v1533
    %2144 = vmatprep.subr.bf16.mxu0 %v1526
    %2145 = vmatpush1.bf16.msra.mxu0 %v1525
    %2146 = vmatprep.subr.bf16.mxu0 %v1518
    %2147 = vmatpush1.bf16.msra.mxu0 %v1517
    %2148 = vmatprep.subr.bf16.mxu0 %v1510
    %2149 = vmatpush1.bf16.msra.mxu0 %v1509
    %2150 = vmatprep.subr.bf16.mxu0 %v1502
    %2151 = vmatpush1.bf16.msra.mxu0 %v1501
    %2152 = vmatprep.subr.bf16.mxu0 %v1494
    %2153 = vmatpush1.bf16.msra.mxu0 %v1493
    %2154 = vmatprep.subr.bf16.mxu0 %v1486
    %2155 = vmatpush1.bf16.msra.mxu0 %v1485
    %2156 = vmatprep.subr.bf16.mxu0 %v1478
    %2157 = vmatpush1.bf16.msra.mxu0 %v1477
    %2158 = vmatprep.subr.bf16.mxu0 %v1598
    %2159 = vmatpush2.bf16.msra.mxu0 %v1597
    %2160 = vmatprep.subr.bf16.mxu0 %v1590
    %2161 = vmatpush2.bf16.msra.mxu0 %v1589
    %2162 = vmatprep.subr.bf16.mxu0 %v1582
    %2163 = vmatpush2.bf16.msra.mxu0 %v1581
    %2164 = vmatprep.subr.bf16.mxu0 %v1574
    %2165 = vmatpush2.bf16.msra.mxu0 %v1573
    %2166 = vmatprep.subr.bf16.mxu0 %v1566
    %2167 = vmatpush2.bf16.msra.mxu0 %v1565
    %2168 = vmatprep.subr.bf16.mxu0 %v1558
    %2169 = vmatpush2.bf16.msra.mxu0 %v1557
    %2170 = vmatprep.subr.bf16.mxu0 %v1550
    %2171 = vmatpush2.bf16.msra.mxu0 %v1549
    %2172 = vmatprep.subr.bf16.mxu0 %v1542
    %2173 = vmatpush2.bf16.msra.mxu0 %v1541
    %2174 = vmatprep.mubr.bf16.mxu0 %v276
    %2175 = vmatmul.mubr.bf16.gmra.mxu0 %v275
    %v2176 = vpop.f32.mrf.mxu0
    %v2177 = vadd.f32 %v2136, %v2176
    %v2178 = vpop.f32.mrf.mxu0
    %v2179 = vadd.f32 %v2138, %v2178
    %v2180 = vpop.f32.mrf.mxu0
    %v2181 = vpop.f32.mrf.mxu0
    %2182 = vdwg.mxu0
    %vm2183 = vcmp.ge.f32.partialorder %v1931, 0.0
    %vm2184 = vcmp.ge.f32.partialorder %v1933, 0.0
    %vm2185 = vcmp.ge.f32.partialorder %v2013, 0.0
    %vm2186 = vcmp.ge.f32.partialorder %v2015, 0.0
    %vm2187 = vcmp.ge.f32.partialorder %v2095, 0.0
    %vm2188 = vcmp.ge.f32.partialorder %v2097, 0.0
    %vm2189 = vcmp.ge.f32.partialorder %v2177, 0.0
    %vm2190 = vcmp.ge.f32.partialorder %v2179, 0.0
    %v2191 = vmul.f32 %v1931, 0.01
    %v2192 = vmul.f32 %v1933, 0.01
    %v2193 = vmul.f32 %v2013, 0.01
    %v2194 = vmul.f32 %v2015, 0.01
    %v2195 = vmul.f32 %v2095, 0.01
    %v2196 = vmul.f32 %v2097, 0.01
    %v2197 = vmul.f32 %v2177, 0.01
    %v2198 = vmul.f32 %v2179, 0.01
    %v2199 = vsel %vm2183, %v1931, %v2191
    %v2200 = vsel %vm2184, %v1933, %v2192
    %v2201 = vsel %vm2185, %v2013, %v2193
    %v2202 = vsel %vm2186, %v2015, %v2194
    %v2203 = vsel %vm2187, %v2095, %v2195
    %v2204 = vsel %vm2188, %v2097, %v2196
    %v2205 = vsel %vm2189, %v2177, %v2197
    %v2206 = vsel %vm2190, %v2179, %v2198
    %v2207 = vpack.c.bf16 %v2199, %v2199
    %v2208 = vpack.c.bf16 %v2200, %v2200
    %v2209 = vpack.c.bf16 %v2201, %v2201
    %v2210 = vpack.c.bf16 %v2202, %v2202
    %v2211 = vpack.c.bf16 %v2203, %v2203
    %v2212 = vpack.c.bf16 %v2204, %v2204
    %v2213 = vpack.c.bf16 %v2205, %v2205
    %v2214 = vpack.c.bf16 %v2206, %v2206
    %v2215 = vld [vmem:[#allocation11] sm:$0xf]
    %v2216 = vld [vmem:[#allocation11 + $0x4] sm:$0xf]
    %v2217 = vld [vmem:[#allocation11 + $0x8] sm:$0xf]
    %v2218 = vld [vmem:[#allocation11 + $0xc] sm:$0xf]
    %v2219 = vld [vmem:[#allocation11 + $0x10] sm:$0xf]
    %v2220 = vld [vmem:[#allocation11 + $0x14] sm:$0xf]
    %v2221 = vld [vmem:[#allocation11 + $0x18] sm:$0xf]
    %v2222 = vld [vmem:[#allocation11 + $0x1c] sm:$0xf]
    %v2223 = vld [vmem:[#allocation11 + $0x20] sm:$0xf]
    %v2224 = vld [vmem:[#allocation11 + $0x24] sm:$0xf]
    %v2225 = vld [vmem:[#allocation11 + $0x28] sm:$0xf]
    %v2226 = vld [vmem:[#allocation11 + $0x2c] sm:$0xf]
    %v2227 = vld [vmem:[#allocation11 + $0x30] sm:$0xf]
    %v2228 = vld [vmem:[#allocation11 + $0x34] sm:$0xf]
    %v2229 = vld [vmem:[#allocation11 + $0x38] sm:$0xf]
    %v2230 = vld [vmem:[#allocation11 + $0x3c] sm:$0xf]
    %v2231 = vld [vmem:[#allocation11 + $0x40] sm:$0xf]
    %v2232 = vld [vmem:[#allocation11 + $0x44] sm:$0xf]
    %v2233 = vld [vmem:[#allocation11 + $0x48] sm:$0xf]
    %v2234 = vld [vmem:[#allocation11 + $0x4c] sm:$0xf]
    %v2235 = vld [vmem:[#allocation11 + $0x50] sm:$0xf]
    %v2236 = vld [vmem:[#allocation11 + $0x54] sm:$0xf]
    %v2237 = vld [vmem:[#allocation11 + $0x58] sm:$0xf]
    %v2238 = vld [vmem:[#allocation11 + $0x5c] sm:$0xf]
    %v2239 = vld [vmem:[#allocation11 + $0x60] sm:$0xf]
    %v2240 = vld [vmem:[#allocation11 + $0x64] sm:$0xf]
    %v2241 = vld [vmem:[#allocation11 + $0x68] sm:$0xf]
    %v2242 = vld [vmem:[#allocation11 + $0x6c] sm:$0xf]
    %v2243 = vld [vmem:[#allocation11 + $0x70] sm:$0xf]
    %v2244 = vld [vmem:[#allocation11 + $0x74] sm:$0xf]
    %v2245 = vld [vmem:[#allocation11 + $0x78] sm:$0xf]
    %v2246 = vld [vmem:[#allocation11 + $0x7c] sm:$0xf]
    %v2247 = vld [vmem:[#allocation11 + $0x80] sm:$0xf]
    %v2248 = vld [vmem:[#allocation11 + $0x84] sm:$0xf]
    %v2249 = vld [vmem:[#allocation11 + $0x88] sm:$0xf]
    %v2250 = vld [vmem:[#allocation11 + $0x8c] sm:$0xf]
    %v2251 = vld [vmem:[#allocation11 + $0x90] sm:$0xf]
    %v2252 = vld [vmem:[#allocation11 + $0x94] sm:$0xf]
    %v2253 = vld [vmem:[#allocation11 + $0x98] sm:$0xf]
    %v2254 = vld [vmem:[#allocation11 + $0x9c] sm:$0xf]
    %v2255 = vld [vmem:[#allocation11 + $0xa0] sm:$0xf]
    %v2256 = vld [vmem:[#allocation11 + $0xa4] sm:$0xf]
    %v2257 = vld [vmem:[#allocation11 + $0xa8] sm:$0xf]
    %v2258 = vld [vmem:[#allocation11 + $0xac] sm:$0xf]
    %v2259 = vld [vmem:[#allocation11 + $0xb0] sm:$0xf]
    %v2260 = vld [vmem:[#allocation11 + $0xb4] sm:$0xf]
    %v2261 = vld [vmem:[#allocation11 + $0xb8] sm:$0xf]
    %v2262 = vld [vmem:[#allocation11 + $0xbc] sm:$0xf]
    %v2263 = vld [vmem:[#allocation11 + $0xc0] sm:$0xf]
    %v2264 = vld [vmem:[#allocation11 + $0xc4] sm:$0xf]
    %v2265 = vld [vmem:[#allocation11 + $0xc8] sm:$0xf]
    %v2266 = vld [vmem:[#allocation11 + $0xcc] sm:$0xf]
    %v2267 = vld [vmem:[#allocation11 + $0xd0] sm:$0xf]
    %v2268 = vld [vmem:[#allocation11 + $0xd4] sm:$0xf]
    %v2269 = vld [vmem:[#allocation11 + $0xd8] sm:$0xf]
    %v2270 = vld [vmem:[#allocation11 + $0xdc] sm:$0xf]
    %v2271 = vld [vmem:[#allocation11 + $0xe0] sm:$0xf]
    %v2272 = vld [vmem:[#allocation11 + $0xe4] sm:$0xf]
    %v2273 = vld [vmem:[#allocation11 + $0xe8] sm:$0xf]
    %v2274 = vld [vmem:[#allocation11 + $0xec] sm:$0xf]
    %v2275 = vld [vmem:[#allocation11 + $0xf0] sm:$0xf]
    %v2276 = vld [vmem:[#allocation11 + $0xf4] sm:$0xf]
    %v2277 = vld [vmem:[#allocation11 + $0xf8] sm:$0xf]
    %v2278 = vld [vmem:[#allocation11 + $0xfc] sm:$0xf]
    %v2279 = vld [vmem:[#allocation11 + $0x100] sm:$0xf]
    %v2280 = vld [vmem:[#allocation11 + $0x104] sm:$0xf]
    %v2281 = vld [vmem:[#allocation11 + $0x108] sm:$0xf]
    %v2282 = vld [vmem:[#allocation11 + $0x10c] sm:$0xf]
    %v2283 = vld [vmem:[#allocation11 + $0x110] sm:$0xf]
    %v2284 = vld [vmem:[#allocation11 + $0x114] sm:$0xf]
    %v2285 = vld [vmem:[#allocation11 + $0x118] sm:$0xf]
    %v2286 = vld [vmem:[#allocation11 + $0x11c] sm:$0xf]
    %v2287 = vld [vmem:[#allocation11 + $0x120] sm:$0xf]
    %v2288 = vld [vmem:[#allocation11 + $0x124] sm:$0xf]
    %v2289 = vld [vmem:[#allocation11 + $0x128] sm:$0xf]
    %v2290 = vld [vmem:[#allocation11 + $0x12c] sm:$0xf]
    %v2291 = vld [vmem:[#allocation11 + $0x130] sm:$0xf]
    %v2292 = vld [vmem:[#allocation11 + $0x134] sm:$0xf]
    %v2293 = vld [vmem:[#allocation11 + $0x138] sm:$0xf]
    %v2294 = vld [vmem:[#allocation11 + $0x13c] sm:$0xf]
    %v2295 = vld [vmem:[#allocation11 + $0x140] sm:$0xf]
    %v2296 = vld [vmem:[#allocation11 + $0x144] sm:$0xf]
    %v2297 = vld [vmem:[#allocation11 + $0x148] sm:$0xf]
    %v2298 = vld [vmem:[#allocation11 + $0x14c] sm:$0xf]
    %v2299 = vld [vmem:[#allocation11 + $0x150] sm:$0xf]
    %v2300 = vld [vmem:[#allocation11 + $0x154] sm:$0xf]
    %v2301 = vld [vmem:[#allocation11 + $0x158] sm:$0xf]
    %v2302 = vld [vmem:[#allocation11 + $0x15c] sm:$0xf]
    %v2303 = vld [vmem:[#allocation11 + $0x160] sm:$0xf]
    %v2304 = vld [vmem:[#allocation11 + $0x164] sm:$0xf]
    %v2305 = vld [vmem:[#allocation11 + $0x168] sm:$0xf]
    %v2306 = vld [vmem:[#allocation11 + $0x16c] sm:$0xf]
    %v2307 = vld [vmem:[#allocation11 + $0x170] sm:$0xf]
    %v2308 = vld [vmem:[#allocation11 + $0x174] sm:$0xf]
    %v2309 = vld [vmem:[#allocation11 + $0x178] sm:$0xf]
    %v2310 = vld [vmem:[#allocation11 + $0x17c] sm:$0xf]
    %v2311 = vld [vmem:[#allocation11 + $0x180] sm:$0xf]
    %v2312 = vld [vmem:[#allocation11 + $0x184] sm:$0xf]
    %v2313 = vld [vmem:[#allocation11 + $0x188] sm:$0xf]
    %v2314 = vld [vmem:[#allocation11 + $0x18c] sm:$0xf]
    %v2315 = vld [vmem:[#allocation11 + $0x190] sm:$0xf]
    %v2316 = vld [vmem:[#allocation11 + $0x194] sm:$0xf]
    %v2317 = vld [vmem:[#allocation11 + $0x198] sm:$0xf]
    %v2318 = vld [vmem:[#allocation11 + $0x19c] sm:$0xf]
    %v2319 = vld [vmem:[#allocation11 + $0x1a0] sm:$0xf]
    %v2320 = vld [vmem:[#allocation11 + $0x1a4] sm:$0xf]
    %v2321 = vld [vmem:[#allocation11 + $0x1a8] sm:$0xf]
    %v2322 = vld [vmem:[#allocation11 + $0x1ac] sm:$0xf]
    %v2323 = vld [vmem:[#allocation11 + $0x1b0] sm:$0xf]
    %v2324 = vld [vmem:[#allocation11 + $0x1b4] sm:$0xf]
    %v2325 = vld [vmem:[#allocation11 + $0x1b8] sm:$0xf]
    %v2326 = vld [vmem:[#allocation11 + $0x1bc] sm:$0xf]
    %v2327 = vld [vmem:[#allocation11 + $0x1c0] sm:$0xf]
    %v2328 = vld [vmem:[#allocation11 + $0x1c4] sm:$0xf]
    %v2329 = vld [vmem:[#allocation11 + $0x1c8] sm:$0xf]
    %v2330 = vld [vmem:[#allocation11 + $0x1cc] sm:$0xf]
    %v2331 = vld [vmem:[#allocation11 + $0x1d0] sm:$0xf]
    %v2332 = vld [vmem:[#allocation11 + $0x1d4] sm:$0xf]
    %v2333 = vld [vmem:[#allocation11 + $0x1d8] sm:$0xf]
    %v2334 = vld [vmem:[#allocation11 + $0x1dc] sm:$0xf]
    %v2335 = vld [vmem:[#allocation11 + $0x1e0] sm:$0xf]
    %v2336 = vld [vmem:[#allocation11 + $0x1e4] sm:$0xf]
    %v2337 = vld [vmem:[#allocation11 + $0x1e8] sm:$0xf]
    %v2338 = vld [vmem:[#allocation11 + $0x1ec] sm:$0xf]
    %v2339 = vld [vmem:[#allocation11 + $0x1f0] sm:$0xf]
    %v2340 = vld [vmem:[#allocation11 + $0x1f4] sm:$0xf]
    %v2341 = vld [vmem:[#allocation11 + $0x1f8] sm:$0xf]
    %v2342 = vld [vmem:[#allocation11 + $0x1fc] sm:$0xf]
    %v2343 = vld [vmem:[%s6] sm:$0x1]
    %v2345 = vlaneseq
    %v2346 = vshrl.u32 %v2345, 7
    %v2347 = vsub.s32 0, %v2346
    %v2348 = vrot.slane %v2343, %v2347
    %v2478 = vunpack.c.l.b16 %v2215
    %v2479 = vunpack.c.l.b16 %v2216
    %v2480 = vunpack.c.l.b16 %v2217
    %v2481 = vunpack.c.l.b16 %v2218
    %v2482 = vunpack.c.l.b16 %v2219
    %v2483 = vunpack.c.l.b16 %v2220
    %v2484 = vunpack.c.l.b16 %v2221
    %v2485 = vunpack.c.l.b16 %v2222
    %v2486 = vunpack.c.l.b16 %v2223
    %v2487 = vunpack.c.l.b16 %v2224
    %v2488 = vunpack.c.l.b16 %v2225
    %v2489 = vunpack.c.l.b16 %v2226
    %v2490 = vunpack.c.l.b16 %v2227
    %v2491 = vunpack.c.l.b16 %v2228
    %v2492 = vunpack.c.l.b16 %v2229
    %v2493 = vunpack.c.l.b16 %v2230
    %v2494 = vunpack.c.l.b16 %v2231
    %v2495 = vunpack.c.l.b16 %v2232
    %v2496 = vunpack.c.l.b16 %v2233
    %v2497 = vunpack.c.l.b16 %v2234
    %v2498 = vunpack.c.l.b16 %v2235
    %v2499 = vunpack.c.l.b16 %v2236
    %v2500 = vunpack.c.l.b16 %v2237
    %v2501 = vunpack.c.l.b16 %v2238
    %v2502 = vunpack.c.l.b16 %v2239
    %v2503 = vunpack.c.l.b16 %v2240
    %v2504 = vunpack.c.l.b16 %v2241
    %v2505 = vunpack.c.l.b16 %v2242
    %v2506 = vunpack.c.l.b16 %v2243
    %v2507 = vunpack.c.l.b16 %v2244
    %v2508 = vunpack.c.l.b16 %v2245
    %v2509 = vunpack.c.l.b16 %v2246
    %v2510 = vunpack.c.l.b16 %v2247
    %v2511 = vunpack.c.l.b16 %v2248
    %v2512 = vunpack.c.l.b16 %v2249
    %v2513 = vunpack.c.l.b16 %v2250
    %v2514 = vunpack.c.l.b16 %v2251
    %v2515 = vunpack.c.l.b16 %v2252
    %v2516 = vunpack.c.l.b16 %v2253
    %v2517 = vunpack.c.l.b16 %v2254
    %v2518 = vunpack.c.l.b16 %v2255
    %v2519 = vunpack.c.l.b16 %v2256
    %v2520 = vunpack.c.l.b16 %v2257
    %v2521 = vunpack.c.l.b16 %v2258
    %v2522 = vunpack.c.l.b16 %v2259
    %v2523 = vunpack.c.l.b16 %v2260
    %v2524 = vunpack.c.l.b16 %v2261
    %v2525 = vunpack.c.l.b16 %v2262
    %v2526 = vunpack.c.l.b16 %v2263
    %v2527 = vunpack.c.l.b16 %v2264
    %v2528 = vunpack.c.l.b16 %v2265
    %v2529 = vunpack.c.l.b16 %v2266
    %v2530 = vunpack.c.l.b16 %v2267
    %v2531 = vunpack.c.l.b16 %v2268
    %v2532 = vunpack.c.l.b16 %v2269
    %v2533 = vunpack.c.l.b16 %v2270
    %v2534 = vunpack.c.l.b16 %v2271
    %v2535 = vunpack.c.l.b16 %v2272
    %v2536 = vunpack.c.l.b16 %v2273
    %v2537 = vunpack.c.l.b16 %v2274
    %v2538 = vunpack.c.l.b16 %v2275
    %v2539 = vunpack.c.l.b16 %v2276
    %v2540 = vunpack.c.l.b16 %v2277
    %v2541 = vunpack.c.l.b16 %v2278
    %v2542 = vunpack.c.l.b16 %v2279
    %v2543 = vunpack.c.l.b16 %v2280
    %v2544 = vunpack.c.l.b16 %v2281
    %v2545 = vunpack.c.l.b16 %v2282
    %v2546 = vunpack.c.l.b16 %v2283
    %v2547 = vunpack.c.l.b16 %v2284
    %v2548 = vunpack.c.l.b16 %v2285
    %v2549 = vunpack.c.l.b16 %v2286
    %v2550 = vunpack.c.l.b16 %v2287
    %v2551 = vunpack.c.l.b16 %v2288
    %v2552 = vunpack.c.l.b16 %v2289
    %v2553 = vunpack.c.l.b16 %v2290
    %v2554 = vunpack.c.l.b16 %v2291
    %v2555 = vunpack.c.l.b16 %v2292
    %v2556 = vunpack.c.l.b16 %v2293
    %v2557 = vunpack.c.l.b16 %v2294
    %v2558 = vunpack.c.l.b16 %v2295
    %v2559 = vunpack.c.l.b16 %v2296
    %v2560 = vunpack.c.l.b16 %v2297
    %v2561 = vunpack.c.l.b16 %v2298
    %v2562 = vunpack.c.l.b16 %v2299
    %v2563 = vunpack.c.l.b16 %v2300
    %v2564 = vunpack.c.l.b16 %v2301
    %v2565 = vunpack.c.l.b16 %v2302
    %v2566 = vunpack.c.l.b16 %v2303
    %v2567 = vunpack.c.l.b16 %v2304
    %v2568 = vunpack.c.l.b16 %v2305
    %v2569 = vunpack.c.l.b16 %v2306
    %v2570 = vunpack.c.l.b16 %v2307
    %v2571 = vunpack.c.l.b16 %v2308
    %v2572 = vunpack.c.l.b16 %v2309
    %v2573 = vunpack.c.l.b16 %v2310
    %v2574 = vunpack.c.l.b16 %v2311
    %v2575 = vunpack.c.l.b16 %v2312
    %v2576 = vunpack.c.l.b16 %v2313
    %v2577 = vunpack.c.l.b16 %v2314
    %v2578 = vunpack.c.l.b16 %v2315
    %v2579 = vunpack.c.l.b16 %v2316
    %v2580 = vunpack.c.l.b16 %v2317
    %v2581 = vunpack.c.l.b16 %v2318
    %v2582 = vunpack.c.l.b16 %v2319
    %v2583 = vunpack.c.l.b16 %v2320
    %v2584 = vunpack.c.l.b16 %v2321
    %v2585 = vunpack.c.l.b16 %v2322
    %v2586 = vunpack.c.l.b16 %v2323
    %v2587 = vunpack.c.l.b16 %v2324
    %v2588 = vunpack.c.l.b16 %v2325
    %v2589 = vunpack.c.l.b16 %v2326
    %v2590 = vunpack.c.l.b16 %v2327
    %v2591 = vunpack.c.l.b16 %v2328
    %v2592 = vunpack.c.l.b16 %v2329
    %v2593 = vunpack.c.l.b16 %v2330
    %v2594 = vunpack.c.l.b16 %v2331
    %v2595 = vunpack.c.l.b16 %v2332
    %v2596 = vunpack.c.l.b16 %v2333
    %v2597 = vunpack.c.l.b16 %v2334
    %v2598 = vunpack.c.l.b16 %v2335
    %v2599 = vunpack.c.l.b16 %v2336
    %v2600 = vunpack.c.l.b16 %v2337
    %v2601 = vunpack.c.l.b16 %v2338
    %v2602 = vunpack.c.l.b16 %v2339
    %v2603 = vunpack.c.l.b16 %v2340
    %v2604 = vunpack.c.l.b16 %v2341
    %v2605 = vunpack.c.l.b16 %v2342
    %v2606 = vpack.c.b16 %v2479, %v2478
    %v2607 = vpack.c.b16 %v2481, %v2480
    %v2608 = vpack.c.b16 %v2483, %v2482
    %v2609 = vpack.c.b16 %v2485, %v2484
    %v2610 = vpack.c.b16 %v2487, %v2486
    %v2611 = vpack.c.b16 %v2489, %v2488
    %v2612 = vpack.c.b16 %v2491, %v2490
    %v2613 = vpack.c.b16 %v2493, %v2492
    %v2614 = vpack.c.b16 %v2495, %v2494
    %v2615 = vpack.c.b16 %v2497, %v2496
    %v2616 = vpack.c.b16 %v2499, %v2498
    %v2617 = vpack.c.b16 %v2501, %v2500
    %v2618 = vpack.c.b16 %v2503, %v2502
    %v2619 = vpack.c.b16 %v2505, %v2504
    %v2620 = vpack.c.b16 %v2507, %v2506
    %v2621 = vpack.c.b16 %v2509, %v2508
    %v2622 = vpack.c.b16 %v2511, %v2510
    %v2623 = vpack.c.b16 %v2513, %v2512
    %v2624 = vpack.c.b16 %v2515, %v2514
    %v2625 = vpack.c.b16 %v2517, %v2516
    %v2626 = vpack.c.b16 %v2519, %v2518
    %v2627 = vpack.c.b16 %v2521, %v2520
    %v2628 = vpack.c.b16 %v2523, %v2522
    %v2629 = vpack.c.b16 %v2525, %v2524
    %v2630 = vpack.c.b16 %v2527, %v2526
    %v2631 = vpack.c.b16 %v2529, %v2528
    %v2632 = vpack.c.b16 %v2531, %v2530
    %v2633 = vpack.c.b16 %v2533, %v2532
    %v2634 = vpack.c.b16 %v2535, %v2534
    %v2635 = vpack.c.b16 %v2537, %v2536
    %v2636 = vpack.c.b16 %v2539, %v2538
    %v2637 = vpack.c.b16 %v2541, %v2540
    %v2638 = vpack.c.b16 %v2543, %v2542
    %v2639 = vpack.c.b16 %v2545, %v2544
    %v2640 = vpack.c.b16 %v2547, %v2546
    %v2641 = vpack.c.b16 %v2549, %v2548
    %v2642 = vpack.c.b16 %v2551, %v2550
    %v2643 = vpack.c.b16 %v2553, %v2552
    %v2644 = vpack.c.b16 %v2555, %v2554
    %v2645 = vpack.c.b16 %v2557, %v2556
    %v2646 = vpack.c.b16 %v2559, %v2558
    %v2647 = vpack.c.b16 %v2561, %v2560
    %v2648 = vpack.c.b16 %v2563, %v2562
    %v2649 = vpack.c.b16 %v2565, %v2564
    %v2650 = vpack.c.b16 %v2567, %v2566
    %v2651 = vpack.c.b16 %v2569, %v2568
    %v2652 = vpack.c.b16 %v2571, %v2570
    %v2653 = vpack.c.b16 %v2573, %v2572
    %v2654 = vpack.c.b16 %v2575, %v2574
    %v2655 = vpack.c.b16 %v2577, %v2576
    %v2656 = vpack.c.b16 %v2579, %v2578
    %v2657 = vpack.c.b16 %v2581, %v2580
    %v2658 = vpack.c.b16 %v2583, %v2582
    %v2659 = vpack.c.b16 %v2585, %v2584
    %v2660 = vpack.c.b16 %v2587, %v2586
    %v2661 = vpack.c.b16 %v2589, %v2588
    %v2662 = vpack.c.b16 %v2591, %v2590
    %v2663 = vpack.c.b16 %v2593, %v2592
    %v2664 = vpack.c.b16 %v2595, %v2594
    %v2665 = vpack.c.b16 %v2597, %v2596
    %v2666 = vpack.c.b16 %v2599, %v2598
    %v2667 = vpack.c.b16 %v2601, %v2600
    %v2668 = vpack.c.b16 %v2603, %v2602
    %v2669 = vpack.c.b16 %v2605, %v2604
    %2734 = vmatprep.subr.bf16.mxu0 0
    %2735 = vmatpush1.bf16.msra.mxu0 %v2613
    %2736 = vmatprep.subr.bf16.mxu0 0
    %2737 = vmatpush1.bf16.msra.mxu0 %v2612
    %2738 = vmatprep.subr.bf16.mxu0 0
    %2739 = vmatpush1.bf16.msra.mxu0 %v2611
    %2740 = vmatprep.subr.bf16.mxu0 0
    %2741 = vmatpush1.bf16.msra.mxu0 %v2610
    %2742 = vmatprep.subr.bf16.mxu0 0
    %2743 = vmatpush1.bf16.msra.mxu0 %v2609
    %2744 = vmatprep.subr.bf16.mxu0 0
    %2745 = vmatpush1.bf16.msra.mxu0 %v2608
    %2746 = vmatprep.subr.bf16.mxu0 0
    %2747 = vmatpush1.bf16.msra.mxu0 %v2607
    %2748 = vmatprep.subr.bf16.mxu0 0
    %2749 = vmatpush1.bf16.msra.mxu0 %v2606
    %2750 = vmatprep.subr.bf16.mxu0 0
    %2751 = vmatpush2.bf16.msra.mxu0 %v2621
    %2752 = vmatprep.subr.bf16.mxu0 0
    %2753 = vmatpush2.bf16.msra.mxu0 %v2620
    %2754 = vmatprep.subr.bf16.mxu0 0
    %2755 = vmatpush2.bf16.msra.mxu0 %v2619
    %2756 = vmatprep.subr.bf16.mxu0 0
    %2757 = vmatpush2.bf16.msra.mxu0 %v2618
    %2758 = vmatprep.subr.bf16.mxu0 0
    %2759 = vmatpush2.bf16.msra.mxu0 %v2617
    %2760 = vmatprep.subr.bf16.mxu0 0
    %2761 = vmatpush2.bf16.msra.mxu0 %v2616
    %2762 = vmatprep.subr.bf16.mxu0 0
    %2763 = vmatpush2.bf16.msra.mxu0 %v2615
    %2764 = vmatprep.subr.bf16.mxu0 0
    %2765 = vmatpush2.bf16.msra.mxu0 %v2614
    %2766 = vmatprep.mubr.bf16.mxu0 %v2208
    %2767 = vmatmul.mubr.bf16.gmra.mxu0 %v2207
    %v2768 = vpop.f32.mrf.mxu0
    %v2769 = vadd.f32 %v2348, %v2768
    %v2770 = vpop.f32.mrf.mxu0
    %v2771 = vpop.f32.mrf.mxu0
    %v2772 = vpop.f32.mrf.mxu0
    %2773 = vdwg.mxu0
    %2774 = vmatprep.subr.bf16.mxu0 0
    %2775 = vmatpush1.bf16.msra.mxu0 %v2629
    %2776 = vmatprep.subr.bf16.mxu0 0
    %2777 = vmatpush1.bf16.msra.mxu0 %v2628
    %2778 = vmatprep.subr.bf16.mxu0 0
    %2779 = vmatpush1.bf16.msra.mxu0 %v2627
    %2780 = vmatprep.subr.bf16.mxu0 0
    %2781 = vmatpush1.bf16.msra.mxu0 %v2626
    %2782 = vmatprep.subr.bf16.mxu0 0
    %2783 = vmatpush1.bf16.msra.mxu0 %v2625
    %2784 = vmatprep.subr.bf16.mxu0 0
    %2785 = vmatpush1.bf16.msra.mxu0 %v2624
    %2786 = vmatprep.subr.bf16.mxu0 0
    %2787 = vmatpush1.bf16.msra.mxu0 %v2623
    %2788 = vmatprep.subr.bf16.mxu0 0
    %2789 = vmatpush1.bf16.msra.mxu0 %v2622
    %2790 = vmatprep.subr.bf16.mxu0 0
    %2791 = vmatpush2.bf16.msra.mxu0 %v2637
    %2792 = vmatprep.subr.bf16.mxu0 0
    %2793 = vmatpush2.bf16.msra.mxu0 %v2636
    %2794 = vmatprep.subr.bf16.mxu0 0
    %2795 = vmatpush2.bf16.msra.mxu0 %v2635
    %2796 = vmatprep.subr.bf16.mxu0 0
    %2797 = vmatpush2.bf16.msra.mxu0 %v2634
    %2798 = vmatprep.subr.bf16.mxu0 0
    %2799 = vmatpush2.bf16.msra.mxu0 %v2633
    %2800 = vmatprep.subr.bf16.mxu0 0
    %2801 = vmatpush2.bf16.msra.mxu0 %v2632
    %2802 = vmatprep.subr.bf16.mxu0 0
    %2803 = vmatpush2.bf16.msra.mxu0 %v2631
    %2804 = vmatprep.subr.bf16.mxu0 0
    %2805 = vmatpush2.bf16.msra.mxu0 %v2630
    %2806 = vmatprep.mubr.bf16.mxu0 %v2210
    %2807 = vmatmul.mubr.bf16.gmra.mxu0 %v2209
    %v2808 = vpop.f32.mrf.mxu0
    %v2809 = vadd.f32 %v2769, %v2808
    %v2810 = vpop.f32.mrf.mxu0
    %v2811 = vpop.f32.mrf.mxu0
    %v2812 = vpop.f32.mrf.mxu0
    %2813 = vdwg.mxu0
    %2814 = vmatprep.subr.bf16.mxu0 0
    %2815 = vmatpush1.bf16.msra.mxu0 %v2645
    %2816 = vmatprep.subr.bf16.mxu0 0
    %2817 = vmatpush1.bf16.msra.mxu0 %v2644
    %2818 = vmatprep.subr.bf16.mxu0 0
    %2819 = vmatpush1.bf16.msra.mxu0 %v2643
    %2820 = vmatprep.subr.bf16.mxu0 0
    %2821 = vmatpush1.bf16.msra.mxu0 %v2642
    %2822 = vmatprep.subr.bf16.mxu0 0
    %2823 = vmatpush1.bf16.msra.mxu0 %v2641
    %2824 = vmatprep.subr.bf16.mxu0 0
    %2825 = vmatpush1.bf16.msra.mxu0 %v2640
    %2826 = vmatprep.subr.bf16.mxu0 0
    %2827 = vmatpush1.bf16.msra.mxu0 %v2639
    %2828 = vmatprep.subr.bf16.mxu0 0
    %2829 = vmatpush1.bf16.msra.mxu0 %v2638
    %2830 = vmatprep.subr.bf16.mxu0 0
    %2831 = vmatpush2.bf16.msra.mxu0 %v2653
    %2832 = vmatprep.subr.bf16.mxu0 0
    %2833 = vmatpush2.bf16.msra.mxu0 %v2652
    %2834 = vmatprep.subr.bf16.mxu0 0
    %2835 = vmatpush2.bf16.msra.mxu0 %v2651
    %2836 = vmatprep.subr.bf16.mxu0 0
    %2837 = vmatpush2.bf16.msra.mxu0 %v2650
    %2838 = vmatprep.subr.bf16.mxu0 0
    %2839 = vmatpush2.bf16.msra.mxu0 %v2649
    %2840 = vmatprep.subr.bf16.mxu0 0
    %2841 = vmatpush2.bf16.msra.mxu0 %v2648
    %2842 = vmatprep.subr.bf16.mxu0 0
    %2843 = vmatpush2.bf16.msra.mxu0 %v2647
    %2844 = vmatprep.subr.bf16.mxu0 0
    %2845 = vmatpush2.bf16.msra.mxu0 %v2646
    %2846 = vmatprep.mubr.bf16.mxu0 %v2212
    %2847 = vmatmul.mubr.bf16.gmra.mxu0 %v2211
    %v2848 = vpop.f32.mrf.mxu0
    %v2849 = vadd.f32 %v2809, %v2848
    %v2850 = vpop.f32.mrf.mxu0
    %v2851 = vpop.f32.mrf.mxu0
    %v2852 = vpop.f32.mrf.mxu0
    %2853 = vdwg.mxu0
    %2854 = vmatprep.subr.bf16.mxu0 0
    %2855 = vmatpush1.bf16.msra.mxu0 %v2661
    %2856 = vmatprep.subr.bf16.mxu0 0
    %2857 = vmatpush1.bf16.msra.mxu0 %v2660
    %2858 = vmatprep.subr.bf16.mxu0 0
    %2859 = vmatpush1.bf16.msra.mxu0 %v2659
    %2860 = vmatprep.subr.bf16.mxu0 0
    %2861 = vmatpush1.bf16.msra.mxu0 %v2658
    %2862 = vmatprep.subr.bf16.mxu0 0
    %2863 = vmatpush1.bf16.msra.mxu0 %v2657
    %2864 = vmatprep.subr.bf16.mxu0 0
    %2865 = vmatpush1.bf16.msra.mxu0 %v2656
    %2866 = vmatprep.subr.bf16.mxu0 0
    %2867 = vmatpush1.bf16.msra.mxu0 %v2655
    %2868 = vmatprep.subr.bf16.mxu0 0
    %2869 = vmatpush1.bf16.msra.mxu0 %v2654
    %2870 = vmatprep.subr.bf16.mxu0 0
    %2871 = vmatpush2.bf16.msra.mxu0 %v2669
    %2872 = vmatprep.subr.bf16.mxu0 0
    %2873 = vmatpush2.bf16.msra.mxu0 %v2668
    %2874 = vmatprep.subr.bf16.mxu0 0
    %2875 = vmatpush2.bf16.msra.mxu0 %v2667
    %2876 = vmatprep.subr.bf16.mxu0 0
    %2877 = vmatpush2.bf16.msra.mxu0 %v2666
    %2878 = vmatprep.subr.bf16.mxu0 0
    %2879 = vmatpush2.bf16.msra.mxu0 %v2665
    %2880 = vmatprep.subr.bf16.mxu0 0
    %2881 = vmatpush2.bf16.msra.mxu0 %v2664
    %2882 = vmatprep.subr.bf16.mxu0 0
    %2883 = vmatpush2.bf16.msra.mxu0 %v2663
    %2884 = vmatprep.subr.bf16.mxu0 0
    %2885 = vmatpush2.bf16.msra.mxu0 %v2662
    %2886 = vmatprep.mubr.bf16.mxu0 %v2214
    %2887 = vmatmul.mubr.bf16.gmra.mxu0 %v2213
    %v2888 = vpop.f32.mrf.mxu0
    %v2889 = vadd.f32 %v2849, %v2888
    %v2890 = vpop.f32.mrf.mxu0
    %v2891 = vpop.f32.mrf.mxu0
    %v2892 = vpop.f32.mrf.mxu0
    %2893 = vdwg.mxu0
    %v2894 = vxor.u32 %v2889, 2147483648
    %v2895 = vmul.f32 %v2894, 1.442695
    %v2896 = vpow.pop %v2895
    %v2897 = vadd.f32 %v2896, 1.0
    %v2898 = vrcp.pop %v2897
    %v2899 = vmul.f32 1.0, %v2898
    %2900 = vst [vmem:[#allocation13] sm:$0xff] %v2899
    // Predicated region
    $region54: #{tpu_custom_call.1} parent=1 // pred_check
      _
    $region55: #{tpu_custom_call.1} parent=1 // pred_check_branch
      %2902 = sbr.rel (0) target = $region57
    $region56: #{tpu_custom_call.1} parent=1 // pred_region
      %s2904 = ssub.s32 128, 128
      %2905 = vsyncadd [#allocation4], %s2904
      %s2907 = sshll.u32 [#allocation13], 4
      %s2908 = int_to_ptr.vmem [resolvable:$true] %s2907
      %2910 = dma.vmem_to_hbm [thread:$0]  %s2908, 128, %s7, [#allocation4]
    $region57: #{tpu_custom_call.1} parent=1 // pred_fallthru
      _
    // Predicated region
    $region58: #{tpu_custom_call.1} parent=1 // pred_check
      _
    $region59: #{tpu_custom_call.1} parent=1 // pred_check_branch
      %2912 = sbr.rel (0) target = $region61
    $region60: #{tpu_custom_call.1} parent=1 // pred_region
      %2913 = dma.done [#allocation4], 128
    $region61: #{tpu_custom_call.1} parent=1 // pred_fallthru
      _
    %2914 = vsyncpa [#allocation3], 1
    %2915 = vsyncpa [#allocation6], 1
    %2916 = vsyncpa [#allocation9], 1
    %2917 = vsyncpa [#allocation12], 1
    %2918 = vsyncpa [#allocation4], 1

</llo_original>
